<compile_context>
chip_gen: v5e
topology: v5e:2x2
jax: 0.10.0
libtpu: 0.0.40
codegen_flags: <defaults>
</compile_context>

<pallas_src>
import jax
import jax.numpy as jnp
import numpy as np
from jax.experimental import pallas as pl
from jax.experimental.pallas import tpu as pltpu

# ---- small synthetic shapes consistent with the module's __init__ -----------------
N = 8             # number of sentences (becomes the LSTM "sequence" length, see above)
E = 64            # embedding_dim
HID = 64          # hidden_dim
HD = HID // 2     # per-direction hidden size
G = 8 * HD        # fused gate width = 4 gates * 2 directions * HD = 256
NUM_TAGS = 8      # num_tags (len(vocab))
NEG = -1e9        # padding value for unused tag lanes (must stay f32)


# ------------------------------ in-kernel math --------------------------------------
def _fused_bilstm_layer(xg, whh_fused_bf16):
    """One bidirectional LSTM layer with both directions fused per step.

    xg:             (N, G) f32, precomputed x @ Wih_fused + b (fused gate layout
                    [i_f i_b | f_f f_b | g_f g_b | o_f o_b], each block HD lanes).
    whh_fused_bf16: (2*HD, G) bf16, block-structured recurrent weights.
    Returns the (N, 2*HD) layer output, entirely in registers (no VMEM scratch).
    """
    # Hoist the per-step fwd/bwd row selection out of the serial loop: fwd lanes of
    # step k read xg row k, bwd lanes read row N-1-k (== xg flipped along sequence).
    xg_flip = jnp.concatenate([xg[N - 1 - t:N - t, :] for t in range(N)], axis=0)
    lane_g = jax.lax.broadcasted_iota(jnp.int32, (N, G), 1)
    fwd_lanes = (lane_g % (2 * HD)) < HD
    xg_sel = jnp.where(fwd_lanes, xg, xg_flip)           # (N, G), once per layer

    h = jnp.zeros((1, 2 * HD), jnp.float32)               # [h_f | h_b]
    c = jnp.zeros((1, 2 * HD), jnp.float32)               # [c_f | c_b]
    fwd_rows = [None] * N
    bwd_rows = [None] * N
    for k in range(N):                                     # statically unrolled, N small
        gates = xg_sel[k:k + 1, :] + jnp.dot(h.astype(jnp.bfloat16), whh_fused_bf16,
                                             preferred_element_type=jnp.float32)  # (1, G)
        # one full-width sigmoid + a 64-lane tanh on just the g-gate group
        sig = jax.nn.sigmoid(gates)
        g = jnp.tanh(gates[:, 2 * 2 * HD:3 * 2 * HD])
        i = sig[:, 0 * 2 * HD:1 * 2 * HD]
        f = sig[:, 1 * 2 * HD:2 * 2 * HD]
        o = sig[:, 3 * 2 * HD:4 * 2 * HD]
        c = f * c + i * g
        h = o * jnp.tanh(c)
        fwd_rows[k] = h              # fwd half valid in lanes [:HD], output row k
        bwd_rows[N - 1 - k] = h      # bwd half valid in lanes [HD:], output row N-1-k

    lane = jax.lax.broadcasted_iota(jnp.int32, (N, 2 * HD), 1)
    return jnp.where(lane < HD,
                     jnp.concatenate(fwd_rows, axis=0),
                     jnp.concatenate(bwd_rows, axis=0))    # (N, 2*HD)


# --------------------------------- Pallas kernel ------------------------------------
def bilstm_crf_kernel(embeds_ref, tags_ref, wpack_ref, bpack_ref, loss_ref):
    # wpack rows: 0 = Wih layer0, 1 = Whh layer0, 2 = Wih layer1, 3 = Whh layer1,
    #             4 = W_linear (zero-padded to G lanes).  All (2*HD, G) bf16.
    x = embeds_ref[...].astype(jnp.bfloat16)              # (N, E)
    b0 = bpack_ref[0:1, :]                                 # (1, G) f32
    b1 = bpack_ref[1:2, :]
    crf_bias = bpack_ref[2:3, :]                           # blin + start + end, NEG-padded

    # ---- BiLSTM layer 0 ----
    xg0 = jnp.dot(x, wpack_ref[0], preferred_element_type=jnp.float32) + b0
    h0 = _fused_bilstm_layer(xg0, wpack_ref[1])            # (N, 2*HD)

    # ---- BiLSTM layer 1 ----
    xg1 = jnp.dot(h0.astype(jnp.bfloat16), wpack_ref[2],
                  preferred_element_type=jnp.float32) + b1
    enc = _fused_bilstm_layer(xg1, wpack_ref[3])           # (N, 2*HD)

    # ---- dropout == identity (inference), Linear + seq_len==1 CRF ----
    scores = jnp.dot(enc.astype(jnp.bfloat16), wpack_ref[4],
                     preferred_element_type=jnp.float32) + crf_bias      # (N, G) f32
    tag_iota = jax.lax.broadcasted_iota(jnp.int32, scores.shape, 1)
    onehot = tag_iota == tags_ref[...]                     # tags: (N, 1) int32
    numer = jnp.sum(jnp.where(onehot, scores, 0.0), axis=1, keepdims=True)
    m = jnp.max(scores, axis=1, keepdims=True)
    denom = m + jnp.log(jnp.sum(jnp.exp(scores - m), axis=1, keepdims=True))
    loss_ref[0, 0] = -jnp.mean(numer - denom)


def bert_bilstm_crf_loss(embeds, tags, wpack, bpack):
    out = pl.pallas_call(
        bilstm_crf_kernel,
        out_shape=jax.ShapeDtypeStruct((1, 1), jnp.float32),
        in_specs=[pl.BlockSpec(memory_space=pltpu.MemorySpace.VMEM)] * 4,
        out_specs=pl.BlockSpec(memory_space=pltpu.MemorySpace.SMEM),
    )(embeds, tags, wpack, bpack)
    return out[0, 0]


# ----------------------------- host-side param handling -----------------------------
def _fuse_gate_cols(w_f, w_b):
    """(in, 4*HD) x2 with [i f g o] blocks -> (in, G) with [i_f i_b | f_f f_b | ...]."""
    cols = []
    for gi in range(4):
        cols.append(w_f[:, gi * HD:(gi + 1) * HD])
        cols.append(w_b[:, gi * HD:(gi + 1) * HD])
    return jnp.concatenate(cols, axis=1)


def _fuse_whh(whh_f, whh_b):
    """(HD, 4*HD) x2 -> block-structured (2*HD, G) so [h_f h_b] @ W gives fused gates."""
    z = jnp.zeros((HD, HD), jnp.float32)
    cols = []
    for gi in range(4):
        cols.append(jnp.concatenate([whh_f[:, gi * HD:(gi + 1) * HD], z], axis=0))
        cols.append(jnp.concatenate([z, whh_b[:, gi * HD:(gi + 1) * HD]], axis=0))
    return jnp.concatenate(cols, axis=1)


def init_params(key):
    """Per-direction PyTorch-style weights (pre-transposed to [in, out])."""
    k = 1.0 / np.sqrt(HD)     # PyTorch LSTM default uniform bound
    kl = 1.0 / np.sqrt(HID)   # Linear bound
    ks = jax.random.split(key, 16)
    u = lambda kk, shape, b: jax.random.uniform(kk, shape, jnp.float32, -b, b)
    return dict(
        wih0_f=u(ks[0], (E, 4 * HD), k),       wih0_b=u(ks[1], (E, 4 * HD), k),
        whh0_f=u(ks[2], (HD, 4 * HD), k),      whh0_b=u(ks[3], (HD, 4 * HD), k),
        b0_f=u(ks[4], (1, 4 * HD), k),         b0_b=u(ks[5], (1, 4 * HD), k),
        wih1_f=u(ks[6], (2 * HD, 4 * HD), k),  wih1_b=u(ks[7], (2 * HD, 4 * HD), k),
        whh1_f=u(ks[8], (HD, 4 * HD), k),      whh1_b=u(ks[9], (HD, 4 * HD), k),
        b1_f=u(ks[10], (1, 4 * HD), k),        b1_b=u(ks[11], (1, 4 * HD), k),
        wlin=u(ks[12], (HID, NUM_TAGS), kl),   blin=u(ks[13], (1, NUM_TAGS), kl),
        start_t=u(ks[14], (1, NUM_TAGS), 0.1), end_t=u(ks[15], (1, NUM_TAGS), 0.1),
    )


def pack_params(p):
    """Pack all weights into 2 kernel inputs: wpack (5,2*HD,G) bf16, bpack (3,G) f32."""
    wih0 = _fuse_gate_cols(p['wih0_f'], p['wih0_b'])              # (E, G)
    whh0 = _fuse_whh(p['whh0_f'], p['whh0_b'])                    # (2*HD, G)
    wih1 = _fuse_gate_cols(p['wih1_f'], p['wih1_b'])              # (2*HD, G)
    whh1 = _fuse_whh(p['whh1_f'], p['whh1_b'])                    # (2*HD, G)
    wlin_pad = jnp.zeros((HID, G), jnp.float32).at[:, :NUM_TAGS].set(p['wlin'])
    b0 = _fuse_gate_cols(p['b0_f'], p['b0_b'])                    # (1, G)
    b1 = _fuse_gate_cols(p['b1_f'], p['b1_b'])                    # (1, G)
    crf_bias = jnp.full((1, G), NEG, jnp.float32).at[:, :NUM_TAGS].set(
        p['blin'] + p['start_t'] + p['end_t'])
    wpack = jnp.stack([wih0, whh0, wih1, whh1, wlin_pad]).astype(jnp.bfloat16)  # (5,64,256)
    bpack = jnp.concatenate([b0, b1, crf_bias], axis=0)                         # (3, G)
    return wpack, bpack


# ------------------------ pure-JAX reference (unfused math) -------------------------
def _ref_lstm_dir(x, wih_t, whh_t, b, reverse):
    n = x.shape[0]
    xg = jnp.dot(x.astype(jnp.bfloat16), wih_t.astype(jnp.bfloat16),
                 preferred_element_type=jnp.float32) + b
    h = jnp.zeros((1, HD), jnp.float32)
    c = jnp.zeros((1, HD), jnp.float32)
    outs = [None] * n
    order = range(n - 1, -1, -1) if reverse else range(n)
    for t in order:
        gates = xg[t:t + 1] + jnp.dot(h.astype(jnp.bfloat16),
                                      whh_t.astype(jnp.bfloat16),
                                      preferred_element_type=jnp.float32)
        i = jax.nn.sigmoid(gates[:, 0:HD]); f = jax.nn.sigmoid(gates[:, HD:2 * HD])
        g = jnp.tanh(gates[:, 2 * HD:3 * HD]); o = jax.nn.sigmoid(gates[:, 3 * HD:4 * HD])
        c = f * c + i * g
        h = o * jnp.tanh(c)
        outs[t] = h
    return jnp.concatenate(outs, axis=0)


def reference_loss(embeds, tags, p):
    of = _ref_lstm_dir(embeds, p['wih0_f'], p['whh0_f'], p['b0_f'], False)
    ob = _ref_lstm_dir(embeds, p['wih0_b'], p['whh0_b'], p['b0_b'], True)
    h0 = jnp.concatenate([of, ob], axis=1)
    of = _ref_lstm_dir(h0, p['wih1_f'], p['whh1_f'], p['b1_f'], False)
    ob = _ref_lstm_dir(h0, p['wih1_b'], p['whh1_b'], p['b1_b'], True)
    enc = jnp.concatenate([of, ob], axis=1)
    logits = jnp.dot(enc.astype(jnp.bfloat16), p['wlin'].astype(jnp.bfloat16),
                     preferred_element_type=jnp.float32) + p['blin']
    scores = logits + p['start_t'] + p['end_t']
    numer = jnp.take_along_axis(scores, tags, axis=1)
    denom = jax.nn.logsumexp(scores, axis=1, keepdims=True)
    return -jnp.mean(numer - denom)


if __name__ == "__main__":
    key = jax.random.PRNGKey(0)
    k_emb, k_tag, k_par = jax.random.split(key, 3)

    embeds = jax.random.normal(k_emb, (N, E), jnp.float32)      # text2vec output
    tags = jax.random.randint(k_tag, (N, 1), 0, NUM_TAGS, dtype=jnp.int32)
    raw_params = init_params(k_par)
    wpack, bpack = pack_params(raw_params)

    loss = jax.block_until_ready(
        bert_bilstm_crf_loss(embeds, tags, wpack, bpack))

    ref = jax.block_until_ready(reference_loss(embeds, tags, raw_params))
    np.testing.assert_allclose(np.asarray(loss), np.asarray(ref),
                               rtol=1e-2, atol=1e-2)
    print("KERNEL_OK")
</pallas_src>

<mosaic_0001>
module attributes {stable_mosaic.version = 11 : i64} {
  func.func @bilstm_crf_kernel(%arg0: memref<8x64xf32, #tpu.memory_space<vmem>>, %arg1: memref<8x1xi32, #tpu.memory_space<vmem>>, %arg2: memref<5x64x256xbf16, #tpu.memory_space<vmem>>, %arg3: memref<3x256xf32, #tpu.memory_space<vmem>>, %arg4: memref<1x1xf32, #tpu.memory_space<smem>>) attributes {dimension_semantics = [], scalar_prefetch = 0 : i64, scratch_operands = 0 : i64, tpu.core_type = #tpu.core_type<tc>} {
    %c0 = arith.constant 0 : index
    %c0_0 = arith.constant 0 : index
    %0 = vector.load %arg0[%c0, %c0_0] : memref<8x64xf32, #tpu.memory_space<vmem>>, vector<8x64xf32>
    %1 = arith.truncf %0 : vector<8x64xf32> to vector<8x64xbf16>
    %c0_1 = arith.constant 0 : index
    %c0_2 = arith.constant 0 : index
    %2 = vector.load %arg3[%c0_1, %c0_2] : memref<3x256xf32, #tpu.memory_space<vmem>>, vector<1x256xf32>
    %c1 = arith.constant 1 : index
    %c0_3 = arith.constant 0 : index
    %3 = vector.load %arg3[%c1, %c0_3] : memref<3x256xf32, #tpu.memory_space<vmem>>, vector<1x256xf32>
    %c2 = arith.constant 2 : index
    %c0_4 = arith.constant 0 : index
    %4 = vector.load %arg3[%c2, %c0_4] : memref<3x256xf32, #tpu.memory_space<vmem>>, vector<1x256xf32>
    %c0_5 = arith.constant 0 : index
    %c0_6 = arith.constant 0 : index
    %c0_7 = arith.constant 0 : index
    %5 = vector.load %arg2[%c0_5, %c0_6, %c0_7] : memref<5x64x256xbf16, #tpu.memory_space<vmem>>, vector<1x64x256xbf16>
    %6 = vector.shape_cast %5 : vector<1x64x256xbf16> to vector<64x256xbf16>
    %cst = arith.constant dense<0.000000e+00> : vector<8x256xf32>
    %7 = tpu.matmul %1, %6, %cst {dimension_numbers = #tpu.dot_dimension_numbers<[1], [0], [0], [1], [0, 0, 1, 1], [], []>} : vector<8x64xbf16>, vector<64x256xbf16>, vector<8x256xf32> -> vector<8x256xf32>
    %8 = vector.broadcast %2 : vector<1x256xf32> to vector<8x256xf32>
    %9 = arith.addf %7, %8 : vector<8x256xf32>
    %c1_8 = arith.constant 1 : index
    %c0_9 = arith.constant 0 : index
    %c0_10 = arith.constant 0 : index
    %10 = vector.load %arg2[%c1_8, %c0_9, %c0_10] : memref<5x64x256xbf16, #tpu.memory_space<vmem>>, vector<1x64x256xbf16>
    %11 = vector.shape_cast %10 : vector<1x64x256xbf16> to vector<64x256xbf16>
    %12 = vector.extract_strided_slice %9 {offsets = [7, 0], sizes = [1, 256], strides = [1, 1]} : vector<8x256xf32> to vector<1x256xf32>
    %13 = vector.extract_strided_slice %9 {offsets = [6, 0], sizes = [1, 256], strides = [1, 1]} : vector<8x256xf32> to vector<1x256xf32>
    %14 = vector.extract_strided_slice %9 {offsets = [5, 0], sizes = [1, 256], strides = [1, 1]} : vector<8x256xf32> to vector<1x256xf32>
    %15 = vector.extract_strided_slice %9 {offsets = [4, 0], sizes = [1, 256], strides = [1, 1]} : vector<8x256xf32> to vector<1x256xf32>
    %16 = vector.extract_strided_slice %9 {offsets = [3, 0], sizes = [1, 256], strides = [1, 1]} : vector<8x256xf32> to vector<1x256xf32>
    %17 = vector.extract_strided_slice %9 {offsets = [2, 0], sizes = [1, 256], strides = [1, 1]} : vector<8x256xf32> to vector<1x256xf32>
    %18 = vector.extract_strided_slice %9 {offsets = [1, 0], sizes = [1, 256], strides = [1, 1]} : vector<8x256xf32> to vector<1x256xf32>
    %19 = vector.extract_strided_slice %9 {offsets = [0, 0], sizes = [1, 256], strides = [1, 1]} : vector<8x256xf32> to vector<1x256xf32>
    %20 = tpu.concatenate %12, %13, %14, %15, %16, %17, %18, %19 in 0 : vector<1x256xf32>, vector<1x256xf32>, vector<1x256xf32>, vector<1x256xf32>, vector<1x256xf32>, vector<1x256xf32>, vector<1x256xf32>, vector<1x256xf32> -> vector<8x256xf32>
    %21 = tpu.iota {dimensions = array<i32: 1>} : vector<8x256xi32>
    %c64_i32 = arith.constant 64 : i32
    %c0_i32 = arith.constant 0 : i32
    %22 = arith.cmpi eq, %c64_i32, %c0_i32 : i32
    %c1_i32 = arith.constant 1 : i32
    %23 = arith.select %22, %c1_i32, %c64_i32 : i32
    %24 = vector.broadcast %23 : i32 to vector<8x256xi32>
    %25 = arith.remsi %21, %24 : vector<8x256xi32>
    %c0_i32_11 = arith.constant 0 : i32
    %26 = vector.broadcast %c0_i32_11 : i32 to vector<8x256xi32>
    %27 = arith.cmpi ne, %25, %26 : vector<8x256xi32>
    %c0_i32_12 = arith.constant 0 : i32
    %28 = vector.broadcast %c0_i32_12 : i32 to vector<8x256xi32>
    %29 = arith.cmpi slt, %25, %28 : vector<8x256xi32>
    %c0_i32_13 = arith.constant 0 : i32
    %30 = arith.cmpi slt, %23, %c0_i32_13 : i32
    %31 = vector.broadcast %30 : i1 to vector<8x256xi1>
    %32 = vector.broadcast %31 : vector<8x256xi1> to vector<8x256xi1>
    %33 = arith.xori %29, %32 : vector<8x256xi1>
    %34 = arith.andi %33, %27 : vector<8x256xi1>
    %35 = vector.broadcast %23 : i32 to vector<8x256xi32>
    %36 = arith.addi %25, %35 : vector<8x256xi32>
    %37 = arith.select %34, %36, %25 : vector<8x256xi1>, vector<8x256xi32>
    %c32_i32 = arith.constant 32 : i32
    %38 = vector.broadcast %c32_i32 : i32 to vector<8x256xi32>
    %39 = arith.cmpi slt, %37, %38 : vector<8x256xi32>
    %40 = arith.select %39, %9, %20 : vector<8x256xi1>, vector<8x256xf32>
    %cst_14 = arith.constant 0.000000e+00 : f32
    %41 = vector.broadcast %cst_14 : f32 to vector<1x64xf32>
    %cst_15 = arith.constant 0.000000e+00 : f32
    %42 = vector.broadcast %cst_15 : f32 to vector<1x64xf32>
    %43 = vector.extract_strided_slice %40 {offsets = [0, 0], sizes = [1, 256], strides = [1, 1]} : vector<8x256xf32> to vector<1x256xf32>
    %44 = arith.truncf %41 : vector<1x64xf32> to vector<1x64xbf16>
    %cst_16 = arith.constant dense<0.000000e+00> : vector<1x256xf32>
    %45 = tpu.matmul %44, %11, %cst_16 {dimension_numbers = #tpu.dot_dimension_numbers<[1], [0], [0], [1], [0, 0, 1, 1], [], []>} : vector<1x64xbf16>, vector<64x256xbf16>, vector<1x256xf32> -> vector<1x256xf32>
    %46 = arith.addf %43, %45 : vector<1x256xf32>
    %47 = arith.negf %46 : vector<1x256xf32>
    %48 = math.exp %47 : vector<1x256xf32>
    %cst_17 = arith.constant 1.000000e+00 : f32
    %49 = vector.broadcast %cst_17 : f32 to vector<1x256xf32>
    %50 = arith.addf %49, %48 : vector<1x256xf32>
    %51 = arith.divf %49, %50 : vector<1x256xf32>
    %52 = vector.extract_strided_slice %46 {offsets = [0, 128], sizes = [1, 64], strides = [1, 1]} : vector<1x256xf32> to vector<1x64xf32>
    %53 = math.tanh %52 : vector<1x64xf32>
    %54 = vector.extract_strided_slice %51 {offsets = [0, 0], sizes = [1, 64], strides = [1, 1]} : vector<1x256xf32> to vector<1x64xf32>
    %55 = vector.extract_strided_slice %51 {offsets = [0, 64], sizes = [1, 64], strides = [1, 1]} : vector<1x256xf32> to vector<1x64xf32>
    %56 = vector.extract_strided_slice %51 {offsets = [0, 192], sizes = [1, 64], strides = [1, 1]} : vector<1x256xf32> to vector<1x64xf32>
    %57 = arith.mulf %55, %42 : vector<1x64xf32>
    %58 = arith.mulf %54, %53 : vector<1x64xf32>
    %59 = arith.addf %57, %58 : vector<1x64xf32>
    %60 = math.tanh %59 : vector<1x64xf32>
    %61 = arith.mulf %56, %60 : vector<1x64xf32>
    %62 = vector.extract_strided_slice %40 {offsets = [1, 0], sizes = [1, 256], strides = [1, 1]} : vector<8x256xf32> to vector<1x256xf32>
    %63 = arith.truncf %61 : vector<1x64xf32> to vector<1x64xbf16>
    %cst_18 = arith.constant dense<0.000000e+00> : vector<1x256xf32>
    %64 = tpu.matmul %63, %11, %cst_18 {dimension_numbers = #tpu.dot_dimension_numbers<[1], [0], [0], [1], [0, 0, 1, 1], [], []>} : vector<1x64xbf16>, vector<64x256xbf16>, vector<1x256xf32> -> vector<1x256xf32>
    %65 = arith.addf %62, %64 : vector<1x256xf32>
    %66 = arith.negf %65 : vector<1x256xf32>
    %67 = math.exp %66 : vector<1x256xf32>
    %cst_19 = arith.constant 1.000000e+00 : f32
    %68 = vector.broadcast %cst_19 : f32 to vector<1x256xf32>
    %69 = arith.addf %68, %67 : vector<1x256xf32>
    %70 = arith.divf %68, %69 : vector<1x256xf32>
    %71 = vector.extract_strided_slice %65 {offsets = [0, 128], sizes = [1, 64], strides = [1, 1]} : vector<1x256xf32> to vector<1x64xf32>
    %72 = math.tanh %71 : vector<1x64xf32>
    %73 = vector.extract_strided_slice %70 {offsets = [0, 0], sizes = [1, 64], strides = [1, 1]} : vector<1x256xf32> to vector<1x64xf32>
    %74 = vector.extract_strided_slice %70 {offsets = [0, 64], sizes = [1, 64], strides = [1, 1]} : vector<1x256xf32> to vector<1x64xf32>
    %75 = vector.extract_strided_slice %70 {offsets = [0, 192], sizes = [1, 64], strides = [1, 1]} : vector<1x256xf32> to vector<1x64xf32>
    %76 = arith.mulf %74, %59 : vector<1x64xf32>
    %77 = arith.mulf %73, %72 : vector<1x64xf32>
    %78 = arith.addf %76, %77 : vector<1x64xf32>
    %79 = math.tanh %78 : vector<1x64xf32>
    %80 = arith.mulf %75, %79 : vector<1x64xf32>
    %81 = vector.extract_strided_slice %40 {offsets = [2, 0], sizes = [1, 256], strides = [1, 1]} : vector<8x256xf32> to vector<1x256xf32>
    %82 = arith.truncf %80 : vector<1x64xf32> to vector<1x64xbf16>
    %cst_20 = arith.constant dense<0.000000e+00> : vector<1x256xf32>
    %83 = tpu.matmul %82, %11, %cst_20 {dimension_numbers = #tpu.dot_dimension_numbers<[1], [0], [0], [1], [0, 0, 1, 1], [], []>} : vector<1x64xbf16>, vector<64x256xbf16>, vector<1x256xf32> -> vector<1x256xf32>
    %84 = arith.addf %81, %83 : vector<1x256xf32>
    %85 = arith.negf %84 : vector<1x256xf32>
    %86 = math.exp %85 : vector<1x256xf32>
    %cst_21 = arith.constant 1.000000e+00 : f32
    %87 = vector.broadcast %cst_21 : f32 to vector<1x256xf32>
    %88 = arith.addf %87, %86 : vector<1x256xf32>
    %89 = arith.divf %87, %88 : vector<1x256xf32>
    %90 = vector.extract_strided_slice %84 {offsets = [0, 128], sizes = [1, 64], strides = [1, 1]} : vector<1x256xf32> to vector<1x64xf32>
    %91 = math.tanh %90 : vector<1x64xf32>
    %92 = vector.extract_strided_slice %89 {offsets = [0, 0], sizes = [1, 64], strides = [1, 1]} : vector<1x256xf32> to vector<1x64xf32>
    %93 = vector.extract_strided_slice %89 {offsets = [0, 64], sizes = [1, 64], strides = [1, 1]} : vector<1x256xf32> to vector<1x64xf32>
    %94 = vector.extract_strided_slice %89 {offsets = [0, 192], sizes = [1, 64], strides = [1, 1]} : vector<1x256xf32> to vector<1x64xf32>
    %95 = arith.mulf %93, %78 : vector<1x64xf32>
    %96 = arith.mulf %92, %91 : vector<1x64xf32>
    %97 = arith.addf %95, %96 : vector<1x64xf32>
    %98 = math.tanh %97 : vector<1x64xf32>
    %99 = arith.mulf %94, %98 : vector<1x64xf32>
    %100 = vector.extract_strided_slice %40 {offsets = [3, 0], sizes = [1, 256], strides = [1, 1]} : vector<8x256xf32> to vector<1x256xf32>
    %101 = arith.truncf %99 : vector<1x64xf32> to vector<1x64xbf16>
    %cst_22 = arith.constant dense<0.000000e+00> : vector<1x256xf32>
    %102 = tpu.matmul %101, %11, %cst_22 {dimension_numbers = #tpu.dot_dimension_numbers<[1], [0], [0], [1], [0, 0, 1, 1], [], []>} : vector<1x64xbf16>, vector<64x256xbf16>, vector<1x256xf32> -> vector<1x256xf32>
    %103 = arith.addf %100, %102 : vector<1x256xf32>
    %104 = arith.negf %103 : vector<1x256xf32>
    %105 = math.exp %104 : vector<1x256xf32>
    %cst_23 = arith.constant 1.000000e+00 : f32
    %106 = vector.broadcast %cst_23 : f32 to vector<1x256xf32>
    %107 = arith.addf %106, %105 : vector<1x256xf32>
    %108 = arith.divf %106, %107 : vector<1x256xf32>
    %109 = vector.extract_strided_slice %103 {offsets = [0, 128], sizes = [1, 64], strides = [1, 1]} : vector<1x256xf32> to vector<1x64xf32>
    %110 = math.tanh %109 : vector<1x64xf32>
    %111 = vector.extract_strided_slice %108 {offsets = [0, 0], sizes = [1, 64], strides = [1, 1]} : vector<1x256xf32> to vector<1x64xf32>
    %112 = vector.extract_strided_slice %108 {offsets = [0, 64], sizes = [1, 64], strides = [1, 1]} : vector<1x256xf32> to vector<1x64xf32>
    %113 = vector.extract_strided_slice %108 {offsets = [0, 192], sizes = [1, 64], strides = [1, 1]} : vector<1x256xf32> to vector<1x64xf32>
    %114 = arith.mulf %112, %97 : vector<1x64xf32>
    %115 = arith.mulf %111, %110 : vector<1x64xf32>
    %116 = arith.addf %114, %115 : vector<1x64xf32>
    %117 = math.tanh %116 : vector<1x64xf32>
    %118 = arith.mulf %113, %117 : vector<1x64xf32>
    %119 = vector.extract_strided_slice %40 {offsets = [4, 0], sizes = [1, 256], strides = [1, 1]} : vector<8x256xf32> to vector<1x256xf32>
    %120 = arith.truncf %118 : vector<1x64xf32> to vector<1x64xbf16>
    %cst_24 = arith.constant dense<0.000000e+00> : vector<1x256xf32>
    %121 = tpu.matmul %120, %11, %cst_24 {dimension_numbers = #tpu.dot_dimension_numbers<[1], [0], [0], [1], [0, 0, 1, 1], [], []>} : vector<1x64xbf16>, vector<64x256xbf16>, vector<1x256xf32> -> vector<1x256xf32>
    %122 = arith.addf %119, %121 : vector<1x256xf32>
    %123 = arith.negf %122 : vector<1x256xf32>
    %124 = math.exp %123 : vector<1x256xf32>
    %cst_25 = arith.constant 1.000000e+00 : f32
    %125 = vector.broadcast %cst_25 : f32 to vector<1x256xf32>
    %126 = arith.addf %125, %124 : vector<1x256xf32>
    %127 = arith.divf %125, %126 : vector<1x256xf32>
    %128 = vector.extract_strided_slice %122 {offsets = [0, 128], sizes = [1, 64], strides = [1, 1]} : vector<1x256xf32> to vector<1x64xf32>
    %129 = math.tanh %128 : vector<1x64xf32>
    %130 = vector.extract_strided_slice %127 {offsets = [0, 0], sizes = [1, 64], strides = [1, 1]} : vector<1x256xf32> to vector<1x64xf32>
    %131 = vector.extract_strided_slice %127 {offsets = [0, 64], sizes = [1, 64], strides = [1, 1]} : vector<1x256xf32> to vector<1x64xf32>
    %132 = vector.extract_strided_slice %127 {offsets = [0, 192], sizes = [1, 64], strides = [1, 1]} : vector<1x256xf32> to vector<1x64xf32>
    %133 = arith.mulf %131, %116 : vector<1x64xf32>
    %134 = arith.mulf %130, %129 : vector<1x64xf32>
    %135 = arith.addf %133, %134 : vector<1x64xf32>
    %136 = math.tanh %135 : vector<1x64xf32>
    %137 = arith.mulf %132, %136 : vector<1x64xf32>
    %138 = vector.extract_strided_slice %40 {offsets = [5, 0], sizes = [1, 256], strides = [1, 1]} : vector<8x256xf32> to vector<1x256xf32>
    %139 = arith.truncf %137 : vector<1x64xf32> to vector<1x64xbf16>
    %cst_26 = arith.constant dense<0.000000e+00> : vector<1x256xf32>
    %140 = tpu.matmul %139, %11, %cst_26 {dimension_numbers = #tpu.dot_dimension_numbers<[1], [0], [0], [1], [0, 0, 1, 1], [], []>} : vector<1x64xbf16>, vector<64x256xbf16>, vector<1x256xf32> -> vector<1x256xf32>
    %141 = arith.addf %138, %140 : vector<1x256xf32>
    %142 = arith.negf %141 : vector<1x256xf32>
    %143 = math.exp %142 : vector<1x256xf32>
    %cst_27 = arith.constant 1.000000e+00 : f32
    %144 = vector.broadcast %cst_27 : f32 to vector<1x256xf32>
    %145 = arith.addf %144, %143 : vector<1x256xf32>
    %146 = arith.divf %144, %145 : vector<1x256xf32>
    %147 = vector.extract_strided_slice %141 {offsets = [0, 128], sizes = [1, 64], strides = [1, 1]} : vector<1x256xf32> to vector<1x64xf32>
    %148 = math.tanh %147 : vector<1x64xf32>
    %149 = vector.extract_strided_slice %146 {offsets = [0, 0], sizes = [1, 64], strides = [1, 1]} : vector<1x256xf32> to vector<1x64xf32>
    %150 = vector.extract_strided_slice %146 {offsets = [0, 64], sizes = [1, 64], strides = [1, 1]} : vector<1x256xf32> to vector<1x64xf32>
    %151 = vector.extract_strided_slice %146 {offsets = [0, 192], sizes = [1, 64], strides = [1, 1]} : vector<1x256xf32> to vector<1x64xf32>
    %152 = arith.mulf %150, %135 : vector<1x64xf32>
    %153 = arith.mulf %149, %148 : vector<1x64xf32>
    %154 = arith.addf %152, %153 : vector<1x64xf32>
    %155 = math.tanh %154 : vector<1x64xf32>
    %156 = arith.mulf %151, %155 : vector<1x64xf32>
    %157 = vector.extract_strided_slice %40 {offsets = [6, 0], sizes = [1, 256], strides = [1, 1]} : vector<8x256xf32> to vector<1x256xf32>
    %158 = arith.truncf %156 : vector<1x64xf32> to vector<1x64xbf16>
    %cst_28 = arith.constant dense<0.000000e+00> : vector<1x256xf32>
    %159 = tpu.matmul %158, %11, %cst_28 {dimension_numbers = #tpu.dot_dimension_numbers<[1], [0], [0], [1], [0, 0, 1, 1], [], []>} : vector<1x64xbf16>, vector<64x256xbf16>, vector<1x256xf32> -> vector<1x256xf32>
    %160 = arith.addf %157, %159 : vector<1x256xf32>
    %161 = arith.negf %160 : vector<1x256xf32>
    %162 = math.exp %161 : vector<1x256xf32>
    %cst_29 = arith.constant 1.000000e+00 : f32
    %163 = vector.broadcast %cst_29 : f32 to vector<1x256xf32>
    %164 = arith.addf %163, %162 : vector<1x256xf32>
    %165 = arith.divf %163, %164 : vector<1x256xf32>
    %166 = vector.extract_strided_slice %160 {offsets = [0, 128], sizes = [1, 64], strides = [1, 1]} : vector<1x256xf32> to vector<1x64xf32>
    %167 = math.tanh %166 : vector<1x64xf32>
    %168 = vector.extract_strided_slice %165 {offsets = [0, 0], sizes = [1, 64], strides = [1, 1]} : vector<1x256xf32> to vector<1x64xf32>
    %169 = vector.extract_strided_slice %165 {offsets = [0, 64], sizes = [1, 64], strides = [1, 1]} : vector<1x256xf32> to vector<1x64xf32>
    %170 = vector.extract_strided_slice %165 {offsets = [0, 192], sizes = [1, 64], strides = [1, 1]} : vector<1x256xf32> to vector<1x64xf32>
    %171 = arith.mulf %169, %154 : vector<1x64xf32>
    %172 = arith.mulf %168, %167 : vector<1x64xf32>
    %173 = arith.addf %171, %172 : vector<1x64xf32>
    %174 = math.tanh %173 : vector<1x64xf32>
    %175 = arith.mulf %170, %174 : vector<1x64xf32>
    %176 = vector.extract_strided_slice %40 {offsets = [7, 0], sizes = [1, 256], strides = [1, 1]} : vector<8x256xf32> to vector<1x256xf32>
    %177 = arith.truncf %175 : vector<1x64xf32> to vector<1x64xbf16>
    %cst_30 = arith.constant dense<0.000000e+00> : vector<1x256xf32>
    %178 = tpu.matmul %177, %11, %cst_30 {dimension_numbers = #tpu.dot_dimension_numbers<[1], [0], [0], [1], [0, 0, 1, 1], [], []>} : vector<1x64xbf16>, vector<64x256xbf16>, vector<1x256xf32> -> vector<1x256xf32>
    %179 = arith.addf %176, %178 : vector<1x256xf32>
    %180 = arith.negf %179 : vector<1x256xf32>
    %181 = math.exp %180 : vector<1x256xf32>
    %cst_31 = arith.constant 1.000000e+00 : f32
    %182 = vector.broadcast %cst_31 : f32 to vector<1x256xf32>
    %183 = arith.addf %182, %181 : vector<1x256xf32>
    %184 = arith.divf %182, %183 : vector<1x256xf32>
    %185 = vector.extract_strided_slice %179 {offsets = [0, 128], sizes = [1, 64], strides = [1, 1]} : vector<1x256xf32> to vector<1x64xf32>
    %186 = math.tanh %185 : vector<1x64xf32>
    %187 = vector.extract_strided_slice %184 {offsets = [0, 0], sizes = [1, 64], strides = [1, 1]} : vector<1x256xf32> to vector<1x64xf32>
    %188 = vector.extract_strided_slice %184 {offsets = [0, 64], sizes = [1, 64], strides = [1, 1]} : vector<1x256xf32> to vector<1x64xf32>
    %189 = vector.extract_strided_slice %184 {offsets = [0, 192], sizes = [1, 64], strides = [1, 1]} : vector<1x256xf32> to vector<1x64xf32>
    %190 = arith.mulf %188, %173 : vector<1x64xf32>
    %191 = arith.mulf %187, %186 : vector<1x64xf32>
    %192 = arith.addf %190, %191 : vector<1x64xf32>
    %193 = math.tanh %192 : vector<1x64xf32>
    %194 = arith.mulf %189, %193 : vector<1x64xf32>
    %195 = tpu.iota {dimensions = array<i32: 1>} : vector<8x64xi32>
    %c32_i32_32 = arith.constant 32 : i32
    %196 = vector.broadcast %c32_i32_32 : i32 to vector<8x64xi32>
    %197 = arith.cmpi slt, %195, %196 : vector<8x64xi32>
    %198 = tpu.concatenate %61, %80, %99, %118, %137, %156, %175, %194 in 0 : vector<1x64xf32>, vector<1x64xf32>, vector<1x64xf32>, vector<1x64xf32>, vector<1x64xf32>, vector<1x64xf32>, vector<1x64xf32>, vector<1x64xf32> -> vector<8x64xf32>
    %199 = tpu.concatenate %194, %175, %156, %137, %118, %99, %80, %61 in 0 : vector<1x64xf32>, vector<1x64xf32>, vector<1x64xf32>, vector<1x64xf32>, vector<1x64xf32>, vector<1x64xf32>, vector<1x64xf32>, vector<1x64xf32> -> vector<8x64xf32>
    %200 = arith.select %197, %198, %199 : vector<8x64xi1>, vector<8x64xf32>
    %201 = arith.truncf %200 : vector<8x64xf32> to vector<8x64xbf16>
    %c2_33 = arith.constant 2 : index
    %c0_34 = arith.constant 0 : index
    %c0_35 = arith.constant 0 : index
    %202 = vector.load %arg2[%c2_33, %c0_34, %c0_35] : memref<5x64x256xbf16, #tpu.memory_space<vmem>>, vector<1x64x256xbf16>
    %203 = vector.shape_cast %202 : vector<1x64x256xbf16> to vector<64x256xbf16>
    %cst_36 = arith.constant dense<0.000000e+00> : vector<8x256xf32>
    %204 = tpu.matmul %201, %203, %cst_36 {dimension_numbers = #tpu.dot_dimension_numbers<[1], [0], [0], [1], [0, 0, 1, 1], [], []>} : vector<8x64xbf16>, vector<64x256xbf16>, vector<8x256xf32> -> vector<8x256xf32>
    %205 = vector.broadcast %3 : vector<1x256xf32> to vector<8x256xf32>
    %206 = arith.addf %204, %205 : vector<8x256xf32>
    %c3 = arith.constant 3 : index
    %c0_37 = arith.constant 0 : index
    %c0_38 = arith.constant 0 : index
    %207 = vector.load %arg2[%c3, %c0_37, %c0_38] : memref<5x64x256xbf16, #tpu.memory_space<vmem>>, vector<1x64x256xbf16>
    %208 = vector.shape_cast %207 : vector<1x64x256xbf16> to vector<64x256xbf16>
    %209 = vector.extract_strided_slice %206 {offsets = [7, 0], sizes = [1, 256], strides = [1, 1]} : vector<8x256xf32> to vector<1x256xf32>
    %210 = vector.extract_strided_slice %206 {offsets = [6, 0], sizes = [1, 256], strides = [1, 1]} : vector<8x256xf32> to vector<1x256xf32>
    %211 = vector.extract_strided_slice %206 {offsets = [5, 0], sizes = [1, 256], strides = [1, 1]} : vector<8x256xf32> to vector<1x256xf32>
    %212 = vector.extract_strided_slice %206 {offsets = [4, 0], sizes = [1, 256], strides = [1, 1]} : vector<8x256xf32> to vector<1x256xf32>
    %213 = vector.extract_strided_slice %206 {offsets = [3, 0], sizes = [1, 256], strides = [1, 1]} : vector<8x256xf32> to vector<1x256xf32>
    %214 = vector.extract_strided_slice %206 {offsets = [2, 0], sizes = [1, 256], strides = [1, 1]} : vector<8x256xf32> to vector<1x256xf32>
    %215 = vector.extract_strided_slice %206 {offsets = [1, 0], sizes = [1, 256], strides = [1, 1]} : vector<8x256xf32> to vector<1x256xf32>
    %216 = vector.extract_strided_slice %206 {offsets = [0, 0], sizes = [1, 256], strides = [1, 1]} : vector<8x256xf32> to vector<1x256xf32>
    %217 = tpu.concatenate %209, %210, %211, %212, %213, %214, %215, %216 in 0 : vector<1x256xf32>, vector<1x256xf32>, vector<1x256xf32>, vector<1x256xf32>, vector<1x256xf32>, vector<1x256xf32>, vector<1x256xf32>, vector<1x256xf32> -> vector<8x256xf32>
    %218 = tpu.iota {dimensions = array<i32: 1>} : vector<8x256xi32>
    %c64_i32_39 = arith.constant 64 : i32
    %c0_i32_40 = arith.constant 0 : i32
    %219 = arith.cmpi eq, %c64_i32_39, %c0_i32_40 : i32
    %c1_i32_41 = arith.constant 1 : i32
    %220 = arith.select %219, %c1_i32_41, %c64_i32_39 : i32
    %221 = vector.broadcast %220 : i32 to vector<8x256xi32>
    %222 = arith.remsi %218, %221 : vector<8x256xi32>
    %c0_i32_42 = arith.constant 0 : i32
    %223 = vector.broadcast %c0_i32_42 : i32 to vector<8x256xi32>
    %224 = arith.cmpi ne, %222, %223 : vector<8x256xi32>
    %c0_i32_43 = arith.constant 0 : i32
    %225 = vector.broadcast %c0_i32_43 : i32 to vector<8x256xi32>
    %226 = arith.cmpi slt, %222, %225 : vector<8x256xi32>
    %c0_i32_44 = arith.constant 0 : i32
    %227 = arith.cmpi slt, %220, %c0_i32_44 : i32
    %228 = vector.broadcast %227 : i1 to vector<8x256xi1>
    %229 = vector.broadcast %228 : vector<8x256xi1> to vector<8x256xi1>
    %230 = arith.xori %226, %229 : vector<8x256xi1>
    %231 = arith.andi %230, %224 : vector<8x256xi1>
    %232 = vector.broadcast %220 : i32 to vector<8x256xi32>
    %233 = arith.addi %222, %232 : vector<8x256xi32>
    %234 = arith.select %231, %233, %222 : vector<8x256xi1>, vector<8x256xi32>
    %c32_i32_45 = arith.constant 32 : i32
    %235 = vector.broadcast %c32_i32_45 : i32 to vector<8x256xi32>
    %236 = arith.cmpi slt, %234, %235 : vector<8x256xi32>
    %237 = arith.select %236, %206, %217 : vector<8x256xi1>, vector<8x256xf32>
    %cst_46 = arith.constant 0.000000e+00 : f32
    %238 = vector.broadcast %cst_46 : f32 to vector<1x64xf32>
    %cst_47 = arith.constant 0.000000e+00 : f32
    %239 = vector.broadcast %cst_47 : f32 to vector<1x64xf32>
    %240 = vector.extract_strided_slice %237 {offsets = [0, 0], sizes = [1, 256], strides = [1, 1]} : vector<8x256xf32> to vector<1x256xf32>
    %241 = arith.truncf %238 : vector<1x64xf32> to vector<1x64xbf16>
    %cst_48 = arith.constant dense<0.000000e+00> : vector<1x256xf32>
    %242 = tpu.matmul %241, %208, %cst_48 {dimension_numbers = #tpu.dot_dimension_numbers<[1], [0], [0], [1], [0, 0, 1, 1], [], []>} : vector<1x64xbf16>, vector<64x256xbf16>, vector<1x256xf32> -> vector<1x256xf32>
    %243 = arith.addf %240, %242 : vector<1x256xf32>
    %244 = arith.negf %243 : vector<1x256xf32>
    %245 = math.exp %244 : vector<1x256xf32>
    %cst_49 = arith.constant 1.000000e+00 : f32
    %246 = vector.broadcast %cst_49 : f32 to vector<1x256xf32>
    %247 = arith.addf %246, %245 : vector<1x256xf32>
    %248 = arith.divf %246, %247 : vector<1x256xf32>
    %249 = vector.extract_strided_slice %243 {offsets = [0, 128], sizes = [1, 64], strides = [1, 1]} : vector<1x256xf32> to vector<1x64xf32>
    %250 = math.tanh %249 : vector<1x64xf32>
    %251 = vector.extract_strided_slice %248 {offsets = [0, 0], sizes = [1, 64], strides = [1, 1]} : vector<1x256xf32> to vector<1x64xf32>
    %252 = vector.extract_strided_slice %248 {offsets = [0, 64], sizes = [1, 64], strides = [1, 1]} : vector<1x256xf32> to vector<1x64xf32>
    %253 = vector.extract_strided_slice %248 {offsets = [0, 192], sizes = [1, 64], strides = [1, 1]} : vector<1x256xf32> to vector<1x64xf32>
    %254 = arith.mulf %252, %239 : vector<1x64xf32>
    %255 = arith.mulf %251, %250 : vector<1x64xf32>
    %256 = arith.addf %254, %255 : vector<1x64xf32>
    %257 = math.tanh %256 : vector<1x64xf32>
    %258 = arith.mulf %253, %257 : vector<1x64xf32>
    %259 = vector.extract_strided_slice %237 {offsets = [1, 0], sizes = [1, 256], strides = [1, 1]} : vector<8x256xf32> to vector<1x256xf32>
    %260 = arith.truncf %258 : vector<1x64xf32> to vector<1x64xbf16>
    %cst_50 = arith.constant dense<0.000000e+00> : vector<1x256xf32>
    %261 = tpu.matmul %260, %208, %cst_50 {dimension_numbers = #tpu.dot_dimension_numbers<[1], [0], [0], [1], [0, 0, 1, 1], [], []>} : vector<1x64xbf16>, vector<64x256xbf16>, vector<1x256xf32> -> vector<1x256xf32>
    %262 = arith.addf %259, %261 : vector<1x256xf32>
    %263 = arith.negf %262 : vector<1x256xf32>
    %264 = math.exp %263 : vector<1x256xf32>
    %cst_51 = arith.constant 1.000000e+00 : f32
    %265 = vector.broadcast %cst_51 : f32 to vector<1x256xf32>
    %266 = arith.addf %265, %264 : vector<1x256xf32>
    %267 = arith.divf %265, %266 : vector<1x256xf32>
    %268 = vector.extract_strided_slice %262 {offsets = [0, 128], sizes = [1, 64], strides = [1, 1]} : vector<1x256xf32> to vector<1x64xf32>
    %269 = math.tanh %268 : vector<1x64xf32>
    %270 = vector.extract_strided_slice %267 {offsets = [0, 0], sizes = [1, 64], strides = [1, 1]} : vector<1x256xf32> to vector<1x64xf32>
    %271 = vector.extract_strided_slice %267 {offsets = [0, 64], sizes = [1, 64], strides = [1, 1]} : vector<1x256xf32> to vector<1x64xf32>
    %272 = vector.extract_strided_slice %267 {offsets = [0, 192], sizes = [1, 64], strides = [1, 1]} : vector<1x256xf32> to vector<1x64xf32>
    %273 = arith.mulf %271, %256 : vector<1x64xf32>
    %274 = arith.mulf %270, %269 : vector<1x64xf32>
    %275 = arith.addf %273, %274 : vector<1x64xf32>
    %276 = math.tanh %275 : vector<1x64xf32>
    %277 = arith.mulf %272, %276 : vector<1x64xf32>
    %278 = vector.extract_strided_slice %237 {offsets = [2, 0], sizes = [1, 256], strides = [1, 1]} : vector<8x256xf32> to vector<1x256xf32>
    %279 = arith.truncf %277 : vector<1x64xf32> to vector<1x64xbf16>
    %cst_52 = arith.constant dense<0.000000e+00> : vector<1x256xf32>
    %280 = tpu.matmul %279, %208, %cst_52 {dimension_numbers = #tpu.dot_dimension_numbers<[1], [0], [0], [1], [0, 0, 1, 1], [], []>} : vector<1x64xbf16>, vector<64x256xbf16>, vector<1x256xf32> -> vector<1x256xf32>
    %281 = arith.addf %278, %280 : vector<1x256xf32>
    %282 = arith.negf %281 : vector<1x256xf32>
    %283 = math.exp %282 : vector<1x256xf32>
    %cst_53 = arith.constant 1.000000e+00 : f32
    %284 = vector.broadcast %cst_53 : f32 to vector<1x256xf32>
    %285 = arith.addf %284, %283 : vector<1x256xf32>
    %286 = arith.divf %284, %285 : vector<1x256xf32>
    %287 = vector.extract_strided_slice %281 {offsets = [0, 128], sizes = [1, 64], strides = [1, 1]} : vector<1x256xf32> to vector<1x64xf32>
    %288 = math.tanh %287 : vector<1x64xf32>
    %289 = vector.extract_strided_slice %286 {offsets = [0, 0], sizes = [1, 64], strides = [1, 1]} : vector<1x256xf32> to vector<1x64xf32>
    %290 = vector.extract_strided_slice %286 {offsets = [0, 64], sizes = [1, 64], strides = [1, 1]} : vector<1x256xf32> to vector<1x64xf32>
    %291 = vector.extract_strided_slice %286 {offsets = [0, 192], sizes = [1, 64], strides = [1, 1]} : vector<1x256xf32> to vector<1x64xf32>
    %292 = arith.mulf %290, %275 : vector<1x64xf32>
    %293 = arith.mulf %289, %288 : vector<1x64xf32>
    %294 = arith.addf %292, %293 : vector<1x64xf32>
    %295 = math.tanh %294 : vector<1x64xf32>
    %296 = arith.mulf %291, %295 : vector<1x64xf32>
    %297 = vector.extract_strided_slice %237 {offsets = [3, 0], sizes = [1, 256], strides = [1, 1]} : vector<8x256xf32> to vector<1x256xf32>
    %298 = arith.truncf %296 : vector<1x64xf32> to vector<1x64xbf16>
    %cst_54 = arith.constant dense<0.000000e+00> : vector<1x256xf32>
    %299 = tpu.matmul %298, %208, %cst_54 {dimension_numbers = #tpu.dot_dimension_numbers<[1], [0], [0], [1], [0, 0, 1, 1], [], []>} : vector<1x64xbf16>, vector<64x256xbf16>, vector<1x256xf32> -> vector<1x256xf32>
    %300 = arith.addf %297, %299 : vector<1x256xf32>
    %301 = arith.negf %300 : vector<1x256xf32>
    %302 = math.exp %301 : vector<1x256xf32>
    %cst_55 = arith.constant 1.000000e+00 : f32
    %303 = vector.broadcast %cst_55 : f32 to vector<1x256xf32>
    %304 = arith.addf %303, %302 : vector<1x256xf32>
    %305 = arith.divf %303, %304 : vector<1x256xf32>
    %306 = vector.extract_strided_slice %300 {offsets = [0, 128], sizes = [1, 64], strides = [1, 1]} : vector<1x256xf32> to vector<1x64xf32>
    %307 = math.tanh %306 : vector<1x64xf32>
    %308 = vector.extract_strided_slice %305 {offsets = [0, 0], sizes = [1, 64], strides = [1, 1]} : vector<1x256xf32> to vector<1x64xf32>
    %309 = vector.extract_strided_slice %305 {offsets = [0, 64], sizes = [1, 64], strides = [1, 1]} : vector<1x256xf32> to vector<1x64xf32>
    %310 = vector.extract_strided_slice %305 {offsets = [0, 192], sizes = [1, 64], strides = [1, 1]} : vector<1x256xf32> to vector<1x64xf32>
    %311 = arith.mulf %309, %294 : vector<1x64xf32>
    %312 = arith.mulf %308, %307 : vector<1x64xf32>
    %313 = arith.addf %311, %312 : vector<1x64xf32>
    %314 = math.tanh %313 : vector<1x64xf32>
    %315 = arith.mulf %310, %314 : vector<1x64xf32>
    %316 = vector.extract_strided_slice %237 {offsets = [4, 0], sizes = [1, 256], strides = [1, 1]} : vector<8x256xf32> to vector<1x256xf32>
    %317 = arith.truncf %315 : vector<1x64xf32> to vector<1x64xbf16>
    %cst_56 = arith.constant dense<0.000000e+00> : vector<1x256xf32>
    %318 = tpu.matmul %317, %208, %cst_56 {dimension_numbers = #tpu.dot_dimension_numbers<[1], [0], [0], [1], [0, 0, 1, 1], [], []>} : vector<1x64xbf16>, vector<64x256xbf16>, vector<1x256xf32> -> vector<1x256xf32>
    %319 = arith.addf %316, %318 : vector<1x256xf32>
    %320 = arith.negf %319 : vector<1x256xf32>
    %321 = math.exp %320 : vector<1x256xf32>
    %cst_57 = arith.constant 1.000000e+00 : f32
    %322 = vector.broadcast %cst_57 : f32 to vector<1x256xf32>
    %323 = arith.addf %322, %321 : vector<1x256xf32>
    %324 = arith.divf %322, %323 : vector<1x256xf32>
    %325 = vector.extract_strided_slice %319 {offsets = [0, 128], sizes = [1, 64], strides = [1, 1]} : vector<1x256xf32> to vector<1x64xf32>
    %326 = math.tanh %325 : vector<1x64xf32>
    %327 = vector.extract_strided_slice %324 {offsets = [0, 0], sizes = [1, 64], strides = [1, 1]} : vector<1x256xf32> to vector<1x64xf32>
    %328 = vector.extract_strided_slice %324 {offsets = [0, 64], sizes = [1, 64], strides = [1, 1]} : vector<1x256xf32> to vector<1x64xf32>
    %329 = vector.extract_strided_slice %324 {offsets = [0, 192], sizes = [1, 64], strides = [1, 1]} : vector<1x256xf32> to vector<1x64xf32>
    %330 = arith.mulf %328, %313 : vector<1x64xf32>
    %331 = arith.mulf %327, %326 : vector<1x64xf32>
    %332 = arith.addf %330, %331 : vector<1x64xf32>
    %333 = math.tanh %332 : vector<1x64xf32>
    %334 = arith.mulf %329, %333 : vector<1x64xf32>
    %335 = vector.extract_strided_slice %237 {offsets = [5, 0], sizes = [1, 256], strides = [1, 1]} : vector<8x256xf32> to vector<1x256xf32>
    %336 = arith.truncf %334 : vector<1x64xf32> to vector<1x64xbf16>
    %cst_58 = arith.constant dense<0.000000e+00> : vector<1x256xf32>
    %337 = tpu.matmul %336, %208, %cst_58 {dimension_numbers = #tpu.dot_dimension_numbers<[1], [0], [0], [1], [0, 0, 1, 1], [], []>} : vector<1x64xbf16>, vector<64x256xbf16>, vector<1x256xf32> -> vector<1x256xf32>
    %338 = arith.addf %335, %337 : vector<1x256xf32>
    %339 = arith.negf %338 : vector<1x256xf32>
    %340 = math.exp %339 : vector<1x256xf32>
    %cst_59 = arith.constant 1.000000e+00 : f32
    %341 = vector.broadcast %cst_59 : f32 to vector<1x256xf32>
    %342 = arith.addf %341, %340 : vector<1x256xf32>
    %343 = arith.divf %341, %342 : vector<1x256xf32>
    %344 = vector.extract_strided_slice %338 {offsets = [0, 128], sizes = [1, 64], strides = [1, 1]} : vector<1x256xf32> to vector<1x64xf32>
    %345 = math.tanh %344 : vector<1x64xf32>
    %346 = vector.extract_strided_slice %343 {offsets = [0, 0], sizes = [1, 64], strides = [1, 1]} : vector<1x256xf32> to vector<1x64xf32>
    %347 = vector.extract_strided_slice %343 {offsets = [0, 64], sizes = [1, 64], strides = [1, 1]} : vector<1x256xf32> to vector<1x64xf32>
    %348 = vector.extract_strided_slice %343 {offsets = [0, 192], sizes = [1, 64], strides = [1, 1]} : vector<1x256xf32> to vector<1x64xf32>
    %349 = arith.mulf %347, %332 : vector<1x64xf32>
    %350 = arith.mulf %346, %345 : vector<1x64xf32>
    %351 = arith.addf %349, %350 : vector<1x64xf32>
    %352 = math.tanh %351 : vector<1x64xf32>
    %353 = arith.mulf %348, %352 : vector<1x64xf32>
    %354 = vector.extract_strided_slice %237 {offsets = [6, 0], sizes = [1, 256], strides = [1, 1]} : vector<8x256xf32> to vector<1x256xf32>
    %355 = arith.truncf %353 : vector<1x64xf32> to vector<1x64xbf16>
    %cst_60 = arith.constant dense<0.000000e+00> : vector<1x256xf32>
    %356 = tpu.matmul %355, %208, %cst_60 {dimension_numbers = #tpu.dot_dimension_numbers<[1], [0], [0], [1], [0, 0, 1, 1], [], []>} : vector<1x64xbf16>, vector<64x256xbf16>, vector<1x256xf32> -> vector<1x256xf32>
    %357 = arith.addf %354, %356 : vector<1x256xf32>
    %358 = arith.negf %357 : vector<1x256xf32>
    %359 = math.exp %358 : vector<1x256xf32>
    %cst_61 = arith.constant 1.000000e+00 : f32
    %360 = vector.broadcast %cst_61 : f32 to vector<1x256xf32>
    %361 = arith.addf %360, %359 : vector<1x256xf32>
    %362 = arith.divf %360, %361 : vector<1x256xf32>
    %363 = vector.extract_strided_slice %357 {offsets = [0, 128], sizes = [1, 64], strides = [1, 1]} : vector<1x256xf32> to vector<1x64xf32>
    %364 = math.tanh %363 : vector<1x64xf32>
    %365 = vector.extract_strided_slice %362 {offsets = [0, 0], sizes = [1, 64], strides = [1, 1]} : vector<1x256xf32> to vector<1x64xf32>
    %366 = vector.extract_strided_slice %362 {offsets = [0, 64], sizes = [1, 64], strides = [1, 1]} : vector<1x256xf32> to vector<1x64xf32>
    %367 = vector.extract_strided_slice %362 {offsets = [0, 192], sizes = [1, 64], strides = [1, 1]} : vector<1x256xf32> to vector<1x64xf32>
    %368 = arith.mulf %366, %351 : vector<1x64xf32>
    %369 = arith.mulf %365, %364 : vector<1x64xf32>
    %370 = arith.addf %368, %369 : vector<1x64xf32>
    %371 = math.tanh %370 : vector<1x64xf32>
    %372 = arith.mulf %367, %371 : vector<1x64xf32>
    %373 = vector.extract_strided_slice %237 {offsets = [7, 0], sizes = [1, 256], strides = [1, 1]} : vector<8x256xf32> to vector<1x256xf32>
    %374 = arith.truncf %372 : vector<1x64xf32> to vector<1x64xbf16>
    %cst_62 = arith.constant dense<0.000000e+00> : vector<1x256xf32>
    %375 = tpu.matmul %374, %208, %cst_62 {dimension_numbers = #tpu.dot_dimension_numbers<[1], [0], [0], [1], [0, 0, 1, 1], [], []>} : vector<1x64xbf16>, vector<64x256xbf16>, vector<1x256xf32> -> vector<1x256xf32>
    %376 = arith.addf %373, %375 : vector<1x256xf32>
    %377 = arith.negf %376 : vector<1x256xf32>
    %378 = math.exp %377 : vector<1x256xf32>
    %cst_63 = arith.constant 1.000000e+00 : f32
    %379 = vector.broadcast %cst_63 : f32 to vector<1x256xf32>
    %380 = arith.addf %379, %378 : vector<1x256xf32>
    %381 = arith.divf %379, %380 : vector<1x256xf32>
    %382 = vector.extract_strided_slice %376 {offsets = [0, 128], sizes = [1, 64], strides = [1, 1]} : vector<1x256xf32> to vector<1x64xf32>
    %383 = math.tanh %382 : vector<1x64xf32>
    %384 = vector.extract_strided_slice %381 {offsets = [0, 0], sizes = [1, 64], strides = [1, 1]} : vector<1x256xf32> to vector<1x64xf32>
    %385 = vector.extract_strided_slice %381 {offsets = [0, 64], sizes = [1, 64], strides = [1, 1]} : vector<1x256xf32> to vector<1x64xf32>
    %386 = vector.extract_strided_slice %381 {offsets = [0, 192], sizes = [1, 64], strides = [1, 1]} : vector<1x256xf32> to vector<1x64xf32>
    %387 = arith.mulf %385, %370 : vector<1x64xf32>
    %388 = arith.mulf %384, %383 : vector<1x64xf32>
    %389 = arith.addf %387, %388 : vector<1x64xf32>
    %390 = math.tanh %389 : vector<1x64xf32>
    %391 = arith.mulf %386, %390 : vector<1x64xf32>
    %392 = tpu.iota {dimensions = array<i32: 1>} : vector<8x64xi32>
    %c32_i32_64 = arith.constant 32 : i32
    %393 = vector.broadcast %c32_i32_64 : i32 to vector<8x64xi32>
    %394 = arith.cmpi slt, %392, %393 : vector<8x64xi32>
    %395 = tpu.concatenate %258, %277, %296, %315, %334, %353, %372, %391 in 0 : vector<1x64xf32>, vector<1x64xf32>, vector<1x64xf32>, vector<1x64xf32>, vector<1x64xf32>, vector<1x64xf32>, vector<1x64xf32>, vector<1x64xf32> -> vector<8x64xf32>
    %396 = tpu.concatenate %391, %372, %353, %334, %315, %296, %277, %258 in 0 : vector<1x64xf32>, vector<1x64xf32>, vector<1x64xf32>, vector<1x64xf32>, vector<1x64xf32>, vector<1x64xf32>, vector<1x64xf32>, vector<1x64xf32> -> vector<8x64xf32>
    %397 = arith.select %394, %395, %396 : vector<8x64xi1>, vector<8x64xf32>
    %398 = arith.truncf %397 : vector<8x64xf32> to vector<8x64xbf16>
    %c4 = arith.constant 4 : index
    %c0_65 = arith.constant 0 : index
    %c0_66 = arith.constant 0 : index
    %399 = vector.load %arg2[%c4, %c0_65, %c0_66] : memref<5x64x256xbf16, #tpu.memory_space<vmem>>, vector<1x64x256xbf16>
    %400 = vector.shape_cast %399 : vector<1x64x256xbf16> to vector<64x256xbf16>
    %cst_67 = arith.constant dense<0.000000e+00> : vector<8x256xf32>
    %401 = tpu.matmul %398, %400, %cst_67 {dimension_numbers = #tpu.dot_dimension_numbers<[1], [0], [0], [1], [0, 0, 1, 1], [], []>} : vector<8x64xbf16>, vector<64x256xbf16>, vector<8x256xf32> -> vector<8x256xf32>
    %402 = vector.broadcast %4 : vector<1x256xf32> to vector<8x256xf32>
    %403 = arith.addf %401, %402 : vector<8x256xf32>
    %404 = tpu.iota {dimensions = array<i32: 1>} : vector<8x256xi32>
    %c0_68 = arith.constant 0 : index
    %c0_69 = arith.constant 0 : index
    %405 = vector.load %arg1[%c0_68, %c0_69] : memref<8x1xi32, #tpu.memory_space<vmem>>, vector<8x1xi32>
    %406 = vector.broadcast %405 : vector<8x1xi32> to vector<8x256xi32>
    %407 = arith.cmpi eq, %404, %406 : vector<8x256xi32>
    %cst_70 = arith.constant 0.000000e+00 : f32
    %408 = vector.broadcast %cst_70 : f32 to vector<8x256xf32>
    %409 = arith.select %407, %403, %408 : vector<8x256xi1>, vector<8x256xf32>
    %cst_71 = arith.constant dense<0.000000e+00> : vector<8xf32>
    %410 = vector.multi_reduction <add>, %409, %cst_71 [1] : vector<8x256xf32> to vector<8xf32>
    %411 = vector.shape_cast %410 : vector<8xf32> to vector<8x1xf32>
    %cst_72 = arith.constant dense<0xFF800000> : vector<8xf32>
    %412 = vector.multi_reduction <maximumf>, %403, %cst_72 [1] : vector<8x256xf32> to vector<8xf32>
    %413 = vector.shape_cast %412 : vector<8xf32> to vector<8x1xf32>
    %414 = vector.broadcast %413 : vector<8x1xf32> to vector<8x256xf32>
    %415 = arith.subf %403, %414 : vector<8x256xf32>
    %416 = math.exp %415 : vector<8x256xf32>
    %cst_73 = arith.constant dense<0.000000e+00> : vector<8xf32>
    %417 = vector.multi_reduction <add>, %416, %cst_73 [1] : vector<8x256xf32> to vector<8xf32>
    %418 = vector.shape_cast %417 : vector<8xf32> to vector<8x1xf32>
    %419 = math.log %418 : vector<8x1xf32>
    %420 = arith.addf %413, %419 : vector<8x1xf32>
    %421 = arith.subf %411, %420 : vector<8x1xf32>
    %422 = vector.shape_cast %421 : vector<8x1xf32> to vector<1x8x1xf32>
    %cst_74 = arith.constant dense<0.000000e+00> : vector<1xf32>
    %423 = vector.multi_reduction <add>, %422, %cst_74 [1, 2] : vector<1x8x1xf32> to vector<1xf32>
    %424 = vector.shape_cast %423 : vector<1xf32> to vector<1x1x1xf32>
    %425 = vector.extract %424[0, 0, 0] : f32 from vector<1x1x1xf32>
    %cst_75 = arith.constant 8.000000e+00 : f32
    %426 = arith.divf %425, %cst_75 : f32
    %cst_76 = arith.constant 0.000000e+00 : f32
    %427 = arith.subf %cst_76, %426 : f32
    %c0_77 = arith.constant 0 : index
    %c0_78 = arith.constant 0 : index
    %428 = memref.load %arg4[%c0_77, %c0_78] : memref<1x1xf32, #tpu.memory_space<smem>>
    memref.store %427, %arg4[%c0_77, %c0_78] : memref<1x1xf32, #tpu.memory_space<smem>>
    return
  }
}

</mosaic_0001>

<llo_original>
// kernel: tpu_custom_call.1
$region0: #{tpu_custom_call.1}
  #allocation0 [shape = 'u32[]', space=smem, size = 0x4, offset = 0x4, fixed_abs, tag = 'smem constant byte address 0x4 - core index']
  #allocation1 [shape = 'u32[72,128]{1,0:T(1,128)}', space=vmem, size = 0x9000, scoped, tag = 'internal scratch']
  %s0 = inlined_call_operand.vmem [shape: f32[8,64], index: 0, kind: input, shape index: {}]
  %s1 = inlined_call_operand.vmem [shape: s32[8,1], index: 1, kind: input, shape index: {}]
  %s2 = inlined_call_operand.hbm [shape: bf16[5,64,256], index: 2, kind: input, shape index: {}]
  %s3 = inlined_call_operand.hbm [shape: f32[3,256], index: 3, kind: input, shape index: {}]
  %s4 = inlined_call_operand.hbm [shape: f32[1,1], index: 4, kind: output, shape index: {}]
  %s5 = sld [smem:[#allocation0]]
  $region34: #{tpu_custom_call.1} parent=0
    _
  %s7 = ssub.s32 1, %s5
  %s8 = scalar_select 0, %s7, %s5
  $region1: #{tpu_custom_call.1} parent=0
    #allocation2 [shape = 'u8[163840]{0}', space=vmem, size = 0x28000, scoped, tag = 'input window, operand 2, single buffered']
    #allocation3 [shape = 's32[1]{0}', space=sflag, size = 0x4, scoped, tag = 'scoped memory for tpu_custom_call.1']
    #allocation4 [shape = 's32[1]{0}', space=sflag, size = 0x4, scoped, tag = 'scoped memory for tpu_custom_call.1']
    #allocation5 [shape = 'u8[4096]{0}', space=vmem, size = 0x1000, scoped, tag = 'input window, operand 3, single buffered']
    #allocation6 [shape = 's32[1]{0}', space=sflag, size = 0x4, scoped, tag = 'scoped memory for tpu_custom_call.1']
    #allocation7 [shape = 'u8[512]{0}', space=smem, size = 0x200, scoped, tag = 'output window, operand 0, single buffered']
    %9 = vsyncpa [#allocation3], 0
    %10 = vsyncpa [#allocation6], 0
    %11 = vsyncpa [#allocation4], 0
    // Predicated region
    $region2: #{tpu_custom_call.1} parent=1 // pred_check
      _
    $region3: #{tpu_custom_call.1} parent=1 // pred_check_branch
      %13 = sbr.rel (0) target = $region5
    $region4: #{tpu_custom_call.1} parent=1 // pred_region
      _
    $region5: #{tpu_custom_call.1} parent=1 // pred_fallthru
      _
    // Predicated region
    $region6: #{tpu_custom_call.1} parent=1 // pred_check
      _
    $region7: #{tpu_custom_call.1} parent=1 // pred_check_branch
      %15 = sbr.rel (0) target = $region9
    $region8: #{tpu_custom_call.1} parent=1 // pred_region
      _
    $region9: #{tpu_custom_call.1} parent=1 // pred_fallthru
      _
    // Predicated region
    $region10: #{tpu_custom_call.1} parent=1 // pred_check
      _
    $region11: #{tpu_custom_call.1} parent=1 // pred_check_branch
      %17 = sbr.rel (0) target = $region13
    $region12: #{tpu_custom_call.1} parent=1 // pred_region
      %19 = vsyncadd [#allocation3], 0
      %s20 = sshll.u32 %s2, 4
      %s21 = int_to_ptr.hbm [resolvable:$true] %s20
      %s22 = sshll.u32 [#allocation2], 4
      %s23 = int_to_ptr.vmem [resolvable:$true] %s22
      %28 = dma.hbm_to_vmem [thread:$0]  %s21, 5120, %s23, [#allocation3], 128, 128, 8
    $region13: #{tpu_custom_call.1} parent=1 // pred_fallthru
      _
    // Predicated region
    $region14: #{tpu_custom_call.1} parent=1 // pred_check
      _
    $region15: #{tpu_custom_call.1} parent=1 // pred_check_branch
      %30 = sbr.rel (0) target = $region17
    $region16: #{tpu_custom_call.1} parent=1 // pred_region
      %32 = vsyncadd [#allocation6], 0
      %s34 = sshll.u32 %s3, 4
      %s35 = int_to_ptr.hbm [resolvable:$true] %s34
      %s36 = sshll.u32 [#allocation5], 4
      %s37 = int_to_ptr.vmem [resolvable:$true] %s36
      %39 = dma.hbm_to_vmem [thread:$0]  %s35, 128, %s37, [#allocation6]
    $region17: #{tpu_custom_call.1} parent=1 // pred_fallthru
      _
    // Predicated region
    $region18: #{tpu_custom_call.1} parent=1 // pred_check
      _
    $region19: #{tpu_custom_call.1} parent=1 // pred_check_branch
      %41 = sbr.rel (0) target = $region21
    $region20: #{tpu_custom_call.1} parent=1 // pred_region
      %43 = dma.done [#allocation3], 5120
    $region21: #{tpu_custom_call.1} parent=1 // pred_fallthru
      _
    // Predicated region
    $region22: #{tpu_custom_call.1} parent=1 // pred_check
      _
    $region23: #{tpu_custom_call.1} parent=1 // pred_check_branch
      %45 = sbr.rel (0) target = $region25
    $region24: #{tpu_custom_call.1} parent=1 // pred_region
      %47 = dma.done [#allocation6], 128
    $region25: #{tpu_custom_call.1} parent=1 // pred_fallthru
      _
    %v49 = vld [vmem:[%s0] sm:$0xff]
    %v50 = vpack.c.bf16 %v49, %v49
    %v51 = vld [vmem:[#allocation5] ss:$4 sm:$0x3]
    %s52 = scalar_lea.vmem [#allocation5], 1
    %v53 = vld [vmem:[%s52] ss:$4 sm:$0x3]
    %s54 = scalar_lea.vmem [#allocation5], 2
    %v55 = vld [vmem:[%s54] ss:$4 sm:$0x3]
    %v56 = vld [vmem:[#allocation2] sm:$0xff]
    %v57 = vld [vmem:[#allocation2 + $0x8] sm:$0xff]
    %v58 = vld [vmem:[#allocation2 + $0x10] sm:$0xff]
    %v59 = vld [vmem:[#allocation2 + $0x18] sm:$0xff]
    %v60 = vld [vmem:[#allocation2 + $0x20] sm:$0xff]
    %v61 = vld [vmem:[#allocation2 + $0x28] sm:$0xff]
    %v62 = vld [vmem:[#allocation2 + $0x30] sm:$0xff]
    %v63 = vld [vmem:[#allocation2 + $0x38] sm:$0xff]
    %v65 = vperm.slane %v51, 0
    %v66 = vperm.slane %v51, 1
    %v77 = vunpack.c.l.b16 %v56
    %v78 = vunpack.c.h.b16 %v56
    %v79 = vunpack.c.l.b16 %v57
    %v80 = vunpack.c.h.b16 %v57
    %v81 = vunpack.c.l.b16 %v58
    %v82 = vunpack.c.h.b16 %v58
    %v83 = vunpack.c.l.b16 %v59
    %v84 = vunpack.c.h.b16 %v59
    %v85 = vunpack.c.l.b16 %v60
    %v86 = vunpack.c.h.b16 %v60
    %v87 = vunpack.c.l.b16 %v61
    %v88 = vunpack.c.h.b16 %v61
    %v89 = vunpack.c.l.b16 %v62
    %v90 = vunpack.c.h.b16 %v62
    %v91 = vunpack.c.l.b16 %v63
    %v92 = vunpack.c.h.b16 %v63
    %v93 = vpack.c.b16 %v79, %v77
    %v94 = vpack.c.b16 %v80, %v78
    %v95 = vpack.c.b16 %v83, %v81
    %v96 = vpack.c.b16 %v84, %v82
    %v97 = vpack.c.b16 %v87, %v85
    %v98 = vpack.c.b16 %v88, %v86
    %v99 = vpack.c.b16 %v91, %v89
    %v100 = vpack.c.b16 %v92, %v90
    %vm109 = vcmask 523264
    %v111 = vsel %vm109, %v50, 0
    %113 = vmatpush.bf16.msra.mxu0 0
    %114 = vmatpush.bf16.msra.mxu0 0
    %115 = vmatpush.bf16.msra.mxu0 0
    %116 = vmatpush.bf16.msra.mxu0 0
    %117 = vmatpush.bf16.msra.mxu0 %v99
    %118 = vmatpush.bf16.msra.mxu0 %v97
    %119 = vmatpush.bf16.msra.mxu0 %v95
    %120 = vmatpush.bf16.msra.mxu0 %v93
    %121 = vmatmul.bf16.gmra.mxu0 %v111
    %v122 = vpop.f32.mrf.mxu0
    %v123 = vadd.f32 %v65, %v122
    %v124 = vpop.f32.mrf.mxu0
    %125 = vdwg.mxu0
    %126 = vmatpush.bf16.msra.mxu0 0
    %127 = vmatpush.bf16.msra.mxu0 0
    %128 = vmatpush.bf16.msra.mxu0 0
    %129 = vmatpush.bf16.msra.mxu0 0
    %130 = vmatpush.bf16.msra.mxu0 %v100
    %131 = vmatpush.bf16.msra.mxu0 %v98
    %132 = vmatpush.bf16.msra.mxu0 %v96
    %133 = vmatpush.bf16.msra.mxu0 %v94
    %134 = vmatmul.bf16.gmra.mxu0 %v111
    %v135 = vpop.f32.mrf.mxu0
    %v136 = vadd.f32 %v66, %v135
    %v137 = vpop.f32.mrf.mxu0
    %138 = vdwg.mxu0
    %s139 = scalar_lea.vmem [#allocation2], 64
    %v140 = vld [vmem:[%s139] sm:$0xff]
    %v141 = vld [vmem:[%s139 + $0x8] sm:$0xff]
    %v142 = vld [vmem:[%s139 + $0x10] sm:$0xff]
    %v143 = vld [vmem:[%s139 + $0x18] sm:$0xff]
    %v144 = vld [vmem:[%s139 + $0x20] sm:$0xff]
    %v145 = vld [vmem:[%s139 + $0x28] sm:$0xff]
    %v146 = vld [vmem:[%s139 + $0x30] sm:$0xff]
    %v147 = vld [vmem:[%s139 + $0x38] sm:$0xff]
    %v150 = vrot.slane %v123, 7
    %v151 = vrot.slane %v136, 7
    %v154 = vrot.slane %v123, 5
    %v155 = vrot.slane %v136, 5
    %v158 = vrot.slane %v123, 3
    %v159 = vrot.slane %v136, 3
    %v162 = vrot.slane %v123, 1
    %v163 = vrot.slane %v136, 1
    %vm166 = vcmask 1040384
    %v167 = vsel %vm166, %v150, %v154
    %v168 = vsel %vm166, %v151, %v155
    %vm169 = vcmask 1041408
    %v170 = vsel %vm169, %v167, %v158
    %v171 = vsel %vm169, %v168, %v159
    %vm172 = vcmask 1042432
    %v173 = vsel %vm172, %v170, %v162
    %v174 = vsel %vm172, %v171, %v163
    %vm175 = vcmask 1043456
    %v176 = vsel %vm175, %v173, %v150
    %v177 = vsel %vm175, %v174, %v151
    %vm178 = vcmask 1044480
    %v179 = vsel %vm178, %v176, %v154
    %v180 = vsel %vm178, %v177, %v155
    %vm181 = vcmask 1045504
    %v182 = vsel %vm181, %v179, %v158
    %v183 = vsel %vm181, %v180, %v159
    %vm184 = vcmask 1046528
    %v185 = vsel %vm184, %v182, %v162
    %v186 = vsel %vm184, %v183, %v163
    %v187 = vlaneseq
    %v188 = vand.u32 %v187, 127
    %v189 = vadd.s32 %v188, 128
    %vm190 = vcmp.lt.s32.totalorder %v188, 0
    %v191 = vsub.s32 0, %v188
    %v192 = vsel %vm190, %v191, %v188
    %v193 = vshrl.u32 %v192, 6
    %v194 = vand.u32 %v192, 63
    %v195 = vsub.s32 0, %v194
    %v196 = vsel %vm190, %v195, %v194
    %vm197 = vcmp.lt.s32.totalorder %v189, 0
    %v198 = vsub.s32 0, %v189
    %v199 = vsel %vm197, %v198, %v189
    %v200 = vshrl.u32 %v199, 6
    %v201 = vand.u32 %v199, 63
    %v202 = vsub.s32 0, %v201
    %v203 = vsel %vm197, %v202, %v201
    %vm204 = vcmp.ne.s32.totalorder %v196, 0
    %vm205 = vcmp.ne.s32.totalorder %v203, 0
    %vm206 = vcmp.lt.s32.totalorder %v196, 0
    %vm207 = vcmp.lt.s32.totalorder %v203, 0
    %vm208 = vmand %vm206, %vm204
    %vm209 = vmand %vm207, %vm205
    %v210 = vadd.s32 %v196, 64
    %v211 = vadd.s32 %v203, 64
    %v212 = vsel %vm208, %v210, %v196
    %v213 = vsel %vm209, %v211, %v203
    %vm214 = vcmp.lt.s32.totalorder %v212, 32
    %vm215 = vcmp.lt.s32.totalorder %v213, 32
    %v216 = vsel %vm214, %v123, %v185
    %v217 = vsel %vm215, %v136, %v186
    %v226 = vunpack.c.l.b16 %v140
    %v227 = vunpack.c.h.b16 %v140
    %v228 = vunpack.c.l.b16 %v141
    %v229 = vunpack.c.h.b16 %v141
    %v230 = vunpack.c.l.b16 %v142
    %v231 = vunpack.c.h.b16 %v142
    %v232 = vunpack.c.l.b16 %v143
    %v233 = vunpack.c.h.b16 %v143
    %v234 = vunpack.c.l.b16 %v144
    %v235 = vunpack.c.h.b16 %v144
    %v236 = vunpack.c.l.b16 %v145
    %v237 = vunpack.c.h.b16 %v145
    %v238 = vunpack.c.l.b16 %v146
    %v239 = vunpack.c.h.b16 %v146
    %v240 = vunpack.c.l.b16 %v147
    %v241 = vunpack.c.h.b16 %v147
    %v242 = vpack.c.b16 %v228, %v226
    %v243 = vpack.c.b16 %v229, %v227
    %v244 = vpack.c.b16 %v232, %v230
    %v245 = vpack.c.b16 %v233, %v231
    %v246 = vpack.c.b16 %v236, %v234
    %v247 = vpack.c.b16 %v237, %v235
    %v248 = vpack.c.b16 %v240, %v238
    %v249 = vpack.c.b16 %v241, %v239
    %v259 = vsel %vm109, 0, 0
    %261 = vmatpush.bf16.msra.mxu0 0
    %262 = vmatpush.bf16.msra.mxu0 0
    %263 = vmatpush.bf16.msra.mxu0 0
    %264 = vmatpush.bf16.msra.mxu0 0
    %265 = vmatpush.bf16.msra.mxu0 %v248
    %266 = vmatpush.bf16.msra.mxu0 %v246
    %267 = vmatpush.bf16.msra.mxu0 %v244
    %268 = vmatpush.bf16.msra.mxu0 %v242
    %269 = vmatmul.bf16.gmra.mxu0 %v259
    %v270 = vpop.f32.mrf.mxu0
    %v271 = vadd.f32 0.0, %v270
    %v272 = vpop.f32.mrf.mxu0
    %273 = vdwg.mxu0
    %274 = vmatpush.bf16.msra.mxu0 0
    %275 = vmatpush.bf16.msra.mxu0 0
    %276 = vmatpush.bf16.msra.mxu0 0
    %277 = vmatpush.bf16.msra.mxu0 0
    %278 = vmatpush.bf16.msra.mxu0 %v249
    %279 = vmatpush.bf16.msra.mxu0 %v247
    %280 = vmatpush.bf16.msra.mxu0 %v245
    %281 = vmatpush.bf16.msra.mxu0 %v243
    %282 = vmatmul.bf16.gmra.mxu0 %v259
    %v283 = vpop.f32.mrf.mxu0
    %v284 = vadd.f32 0.0, %v283
    %v285 = vpop.f32.mrf.mxu0
    %286 = vdwg.mxu0
    %v287 = vadd.f32 %v216, %v271
    %v288 = vadd.f32 %v217, %v284
    %v289 = vxor.u32 %v287, 2147483648
    %v290 = vxor.u32 %v288, 2147483648
    %v291 = vmul.f32 %v289, 1.442695
    %v292 = vpow.pop %v291
    %v293 = vmul.f32 %v290, 1.442695
    %v294 = vpow.pop %v293
    %v295 = vadd.f32 %v292, 1.0
    %v296 = vadd.f32 %v294, 1.0
    %v297 = vrcp.pop %v295
    %v298 = vmul.f32 %v295, %v297
    %v299 = vsub.f32 1.0, %v298
    %v300 = vmul.f32 %v297, %v299
    %v301 = vadd.f32 %v297, %v300
    %vm302 = vweird.f32 %v295
    %vm303 = vweird.f32 %v297
    %vm304 = vmor %vm302, %vm303
    %v305 = vsel %vm304, %v297, %v301
    %v306 = vand.u32 2147483647, %v295
    %vm307 = vcmp.eq.f32.partialorder %v306, 8.507059e+37
    %v308 = vand.u32 %v295, 2147483648
    %v309 = vor.u32 1.1754944e-38, %v308
    %v310 = vsel %vm307, %v309, %v305
    %v311 = vmul.f32 1.0, %v310
    %v312 = vrcp.pop %v296
    %v313 = vmul.f32 %v296, %v312
    %v314 = vsub.f32 1.0, %v313
    %v315 = vmul.f32 %v312, %v314
    %v316 = vadd.f32 %v312, %v315
    %vm317 = vweird.f32 %v296
    %vm318 = vweird.f32 %v312
    %vm319 = vmor %vm317, %vm318
    %v320 = vsel %vm319, %v312, %v316
    %v321 = vand.u32 2147483647, %v296
    %vm322 = vcmp.eq.f32.partialorder %v321, 8.507059e+37
    %v323 = vand.u32 %v296, 2147483648
    %v324 = vor.u32 1.1754944e-38, %v323
    %v325 = vsel %vm322, %v324, %v320
    %v326 = vmul.f32 1.0, %v325
    %v327 = vtanh.pop %v288
    %v328 = vmul.f32 %v311, 0.0
    %v329 = vmul.f32 %v311, %v327
    %331 = vrot.lane.b32.xlu0 %v329, 64
    %v332 = vpop.permute.xlu0 %331
    %v334 = vadd.f32 %v328, %v332
    %v335 = vtanh.pop %v334
    %v336 = vmul.f32 %v326, %v335
    %v337 = vpack.c.bf16 %v336, %v336
    %339 = vrot.lane.b32.xlu0 %v337, 64
    %v340 = vpop.permute.xlu0 %339
    %v342 = vsel %vm109, %v340, 0
    %344 = vmatpush.bf16.msra.mxu0 0
    %345 = vmatpush.bf16.msra.mxu0 0
    %346 = vmatpush.bf16.msra.mxu0 0
    %347 = vmatpush.bf16.msra.mxu0 0
    %348 = vmatpush.bf16.msra.mxu0 %v248
    %349 = vmatpush.bf16.msra.mxu0 %v246
    %350 = vmatpush.bf16.msra.mxu0 %v244
    %351 = vmatpush.bf16.msra.mxu0 %v242
    %352 = vmatmul.bf16.gmra.mxu0 %v342
    %v353 = vpop.f32.mrf.mxu0
    %v354 = vadd.f32 0.0, %v353
    %v355 = vpop.f32.mrf.mxu0
    %356 = vdwg.mxu0
    %357 = vmatpush.bf16.msra.mxu0 0
    %358 = vmatpush.bf16.msra.mxu0 0
    %359 = vmatpush.bf16.msra.mxu0 0
    %360 = vmatpush.bf16.msra.mxu0 0
    %361 = vmatpush.bf16.msra.mxu0 %v249
    %362 = vmatpush.bf16.msra.mxu0 %v247
    %363 = vmatpush.bf16.msra.mxu0 %v245
    %364 = vmatpush.bf16.msra.mxu0 %v243
    %365 = vmatmul.bf16.gmra.mxu0 %v342
    %v366 = vpop.f32.mrf.mxu0
    %v367 = vadd.f32 0.0, %v366
    %v368 = vpop.f32.mrf.mxu0
    %369 = vdwg.mxu0
    %v372 = vrot.slane %v354, 7
    %v373 = vrot.slane %v367, 7
    %v376 = vadd.f32 %v216, %v372
    %v377 = vadd.f32 %v217, %v373
    %v378 = vxor.u32 %v376, 2147483648
    %v379 = vxor.u32 %v377, 2147483648
    %v380 = vmul.f32 %v378, 1.442695
    %v381 = vpow.pop %v380
    %v382 = vmul.f32 %v379, 1.442695
    %v383 = vpow.pop %v382
    %v384 = vadd.f32 %v381, 1.0
    %v385 = vadd.f32 %v383, 1.0
    %v386 = vrcp.pop %v384
    %v387 = vmul.f32 %v384, %v386
    %v388 = vsub.f32 1.0, %v387
    %v389 = vmul.f32 %v386, %v388
    %v390 = vadd.f32 %v386, %v389
    %vm391 = vweird.f32 %v384
    %vm392 = vweird.f32 %v386
    %vm393 = vmor %vm391, %vm392
    %v394 = vsel %vm393, %v386, %v390
    %v395 = vand.u32 2147483647, %v384
    %vm396 = vcmp.eq.f32.partialorder %v395, 8.507059e+37
    %v397 = vand.u32 %v384, 2147483648
    %v398 = vor.u32 1.1754944e-38, %v397
    %v399 = vsel %vm396, %v398, %v394
    %v400 = vmul.f32 1.0, %v399
    %v401 = vrcp.pop %v385
    %v402 = vmul.f32 %v385, %v401
    %v403 = vsub.f32 1.0, %v402
    %v404 = vmul.f32 %v401, %v403
    %v405 = vadd.f32 %v401, %v404
    %vm406 = vweird.f32 %v385
    %vm407 = vweird.f32 %v401
    %vm408 = vmor %vm406, %vm407
    %v409 = vsel %vm408, %v401, %v405
    %v410 = vand.u32 2147483647, %v385
    %vm411 = vcmp.eq.f32.partialorder %v410, 8.507059e+37
    %v412 = vand.u32 %v385, 2147483648
    %v413 = vor.u32 1.1754944e-38, %v412
    %v414 = vsel %vm411, %v413, %v409
    %v415 = vmul.f32 1.0, %v414
    %v416 = vtanh.pop %v377
    %v418 = vrot.slane %v334, 7
    %v420 = vmul.f32 %v400, %v418
    %v421 = vmul.f32 %v400, %v416
    %423 = vrot.lane.b32.xlu0 %v421, 64
    %v424 = vpop.permute.xlu0 %423
    %v426 = vadd.f32 %v420, %v424
    %v427 = vtanh.pop %v426
    %v428 = vmul.f32 %v415, %v427
    %v429 = vpack.c.bf16 %v428, %v428
    %v431 = vshrl.u32 %v429, 16
    %433 = vrot.lane.b32.xlu0 %v431, 64
    %v434 = vpop.permute.xlu0 %433
    %v436 = vsel %vm109, %v434, 0
    %438 = vmatpush.bf16.msra.mxu0 0
    %439 = vmatpush.bf16.msra.mxu0 0
    %440 = vmatpush.bf16.msra.mxu0 0
    %441 = vmatpush.bf16.msra.mxu0 0
    %442 = vmatpush.bf16.msra.mxu0 %v248
    %443 = vmatpush.bf16.msra.mxu0 %v246
    %444 = vmatpush.bf16.msra.mxu0 %v244
    %445 = vmatpush.bf16.msra.mxu0 %v242
    %446 = vmatmul.bf16.gmra.mxu0 %v436
    %v447 = vpop.f32.mrf.mxu0
    %v448 = vadd.f32 0.0, %v447
    %v449 = vpop.f32.mrf.mxu0
    %450 = vdwg.mxu0
    %451 = vmatpush.bf16.msra.mxu0 0
    %452 = vmatpush.bf16.msra.mxu0 0
    %453 = vmatpush.bf16.msra.mxu0 0
    %454 = vmatpush.bf16.msra.mxu0 0
    %455 = vmatpush.bf16.msra.mxu0 %v249
    %456 = vmatpush.bf16.msra.mxu0 %v247
    %457 = vmatpush.bf16.msra.mxu0 %v245
    %458 = vmatpush.bf16.msra.mxu0 %v243
    %459 = vmatmul.bf16.gmra.mxu0 %v436
    %v460 = vpop.f32.mrf.mxu0
    %v461 = vadd.f32 0.0, %v460
    %v462 = vpop.f32.mrf.mxu0
    %463 = vdwg.mxu0
    %v466 = vrot.slane %v448, 6
    %v467 = vrot.slane %v461, 6
    %v470 = vadd.f32 %v216, %v466
    %v471 = vadd.f32 %v217, %v467
    %v472 = vxor.u32 %v470, 2147483648
    %v473 = vxor.u32 %v471, 2147483648
    %v474 = vmul.f32 %v472, 1.442695
    %v475 = vpow.pop %v474
    %v476 = vmul.f32 %v473, 1.442695
    %v477 = vpow.pop %v476
    %v478 = vadd.f32 %v475, 1.0
    %v479 = vadd.f32 %v477, 1.0
    %v480 = vrcp.pop %v478
    %v481 = vmul.f32 %v478, %v480
    %v482 = vsub.f32 1.0, %v481
    %v483 = vmul.f32 %v480, %v482
    %v484 = vadd.f32 %v480, %v483
    %vm485 = vweird.f32 %v478
    %vm486 = vweird.f32 %v480
    %vm487 = vmor %vm485, %vm486
    %v488 = vsel %vm487, %v480, %v484
    %v489 = vand.u32 2147483647, %v478
    %vm490 = vcmp.eq.f32.partialorder %v489, 8.507059e+37
    %v491 = vand.u32 %v478, 2147483648
    %v492 = vor.u32 1.1754944e-38, %v491
    %v493 = vsel %vm490, %v492, %v488
    %v494 = vmul.f32 1.0, %v493
    %v495 = vrcp.pop %v479
    %v496 = vmul.f32 %v479, %v495
    %v497 = vsub.f32 1.0, %v496
    %v498 = vmul.f32 %v495, %v497
    %v499 = vadd.f32 %v495, %v498
    %vm500 = vweird.f32 %v479
    %vm501 = vweird.f32 %v495
    %vm502 = vmor %vm500, %vm501
    %v503 = vsel %vm502, %v495, %v499
    %v504 = vand.u32 2147483647, %v479
    %vm505 = vcmp.eq.f32.partialorder %v504, 8.507059e+37
    %v506 = vand.u32 %v479, 2147483648
    %v507 = vor.u32 1.1754944e-38, %v506
    %v508 = vsel %vm505, %v507, %v503
    %v509 = vmul.f32 1.0, %v508
    %v510 = vtanh.pop %v471
    %v512 = vrot.slane %v426, 7
    %v514 = vmul.f32 %v494, %v512
    %v515 = vmul.f32 %v494, %v510
    %517 = vrot.lane.b32.xlu0 %v515, 64
    %v518 = vpop.permute.xlu0 %517
    %v520 = vadd.f32 %v514, %v518
    %v521 = vtanh.pop %v520
    %v522 = vmul.f32 %v509, %v521
    %v523 = vpack.c.bf16 %v522, %v522
    %v525 = vrot.slane %v523, 1
    %526 = vrot.lane.b32.xlu0 %v525, 64
    %v527 = vpop.permute.xlu0 %526
    %v529 = vsel %vm109, %v527, 0
    %531 = vmatpush.bf16.msra.mxu0 0
    %532 = vmatpush.bf16.msra.mxu0 0
    %533 = vmatpush.bf16.msra.mxu0 0
    %534 = vmatpush.bf16.msra.mxu0 0
    %535 = vmatpush.bf16.msra.mxu0 %v248
    %536 = vmatpush.bf16.msra.mxu0 %v246
    %537 = vmatpush.bf16.msra.mxu0 %v244
    %538 = vmatpush.bf16.msra.mxu0 %v242
    %539 = vmatmul.bf16.gmra.mxu0 %v529
    %v540 = vpop.f32.mrf.mxu0
    %v541 = vadd.f32 0.0, %v540
    %v542 = vpop.f32.mrf.mxu0
    %543 = vdwg.mxu0
    %544 = vmatpush.bf16.msra.mxu0 0
    %545 = vmatpush.bf16.msra.mxu0 0
    %546 = vmatpush.bf16.msra.mxu0 0
    %547 = vmatpush.bf16.msra.mxu0 0
    %548 = vmatpush.bf16.msra.mxu0 %v249
    %549 = vmatpush.bf16.msra.mxu0 %v247
    %550 = vmatpush.bf16.msra.mxu0 %v245
    %551 = vmatpush.bf16.msra.mxu0 %v243
    %552 = vmatmul.bf16.gmra.mxu0 %v529
    %v553 = vpop.f32.mrf.mxu0
    %v554 = vadd.f32 0.0, %v553
    %v555 = vpop.f32.mrf.mxu0
    %556 = vdwg.mxu0
    %v559 = vrot.slane %v541, 5
    %v560 = vrot.slane %v554, 5
    %v563 = vadd.f32 %v216, %v559
    %v564 = vadd.f32 %v217, %v560
    %v565 = vxor.u32 %v563, 2147483648
    %v566 = vxor.u32 %v564, 2147483648
    %v567 = vmul.f32 %v565, 1.442695
    %v568 = vpow.pop %v567
    %v569 = vmul.f32 %v566, 1.442695
    %v570 = vpow.pop %v569
    %v571 = vadd.f32 %v568, 1.0
    %v572 = vadd.f32 %v570, 1.0
    %v573 = vrcp.pop %v571
    %v574 = vmul.f32 %v571, %v573
    %v575 = vsub.f32 1.0, %v574
    %v576 = vmul.f32 %v573, %v575
    %v577 = vadd.f32 %v573, %v576
    %vm578 = vweird.f32 %v571
    %vm579 = vweird.f32 %v573
    %vm580 = vmor %vm578, %vm579
    %v581 = vsel %vm580, %v573, %v577
    %v582 = vand.u32 2147483647, %v571
    %vm583 = vcmp.eq.f32.partialorder %v582, 8.507059e+37
    %v584 = vand.u32 %v571, 2147483648
    %v585 = vor.u32 1.1754944e-38, %v584
    %v586 = vsel %vm583, %v585, %v581
    %v587 = vmul.f32 1.0, %v586
    %v588 = vrcp.pop %v572
    %v589 = vmul.f32 %v572, %v588
    %v590 = vsub.f32 1.0, %v589
    %v591 = vmul.f32 %v588, %v590
    %v592 = vadd.f32 %v588, %v591
    %vm593 = vweird.f32 %v572
    %vm594 = vweird.f32 %v588
    %vm595 = vmor %vm593, %vm594
    %v596 = vsel %vm595, %v588, %v592
    %v597 = vand.u32 2147483647, %v572
    %vm598 = vcmp.eq.f32.partialorder %v597, 8.507059e+37
    %v599 = vand.u32 %v572, 2147483648
    %v600 = vor.u32 1.1754944e-38, %v599
    %v601 = vsel %vm598, %v600, %v596
    %v602 = vmul.f32 1.0, %v601
    %v603 = vtanh.pop %v564
    %v605 = vrot.slane %v520, 7
    %v607 = vmul.f32 %v587, %v605
    %v608 = vmul.f32 %v587, %v603
    %610 = vrot.lane.b32.xlu0 %v608, 64
    %v611 = vpop.permute.xlu0 %610
    %v613 = vadd.f32 %v607, %v611
    %v614 = vtanh.pop %v613
    %v615 = vmul.f32 %v602, %v614
    %v616 = vpack.c.bf16 %v615, %v615
    %v618 = vshrl.u32 %v616, 16
    %v620 = vrot.slane %v618, 1
    %621 = vrot.lane.b32.xlu0 %v620, 64
    %v622 = vpop.permute.xlu0 %621
    %v624 = vsel %vm109, %v622, 0
    %626 = vmatpush.bf16.msra.mxu0 0
    %627 = vmatpush.bf16.msra.mxu0 0
    %628 = vmatpush.bf16.msra.mxu0 0
    %629 = vmatpush.bf16.msra.mxu0 0
    %630 = vmatpush.bf16.msra.mxu0 %v248
    %631 = vmatpush.bf16.msra.mxu0 %v246
    %632 = vmatpush.bf16.msra.mxu0 %v244
    %633 = vmatpush.bf16.msra.mxu0 %v242
    %634 = vmatmul.bf16.gmra.mxu0 %v624
    %v635 = vpop.f32.mrf.mxu0
    %v636 = vadd.f32 0.0, %v635
    %v637 = vpop.f32.mrf.mxu0
    %638 = vdwg.mxu0
    %639 = vmatpush.bf16.msra.mxu0 0
    %640 = vmatpush.bf16.msra.mxu0 0
    %641 = vmatpush.bf16.msra.mxu0 0
    %642 = vmatpush.bf16.msra.mxu0 0
    %643 = vmatpush.bf16.msra.mxu0 %v249
    %644 = vmatpush.bf16.msra.mxu0 %v247
    %645 = vmatpush.bf16.msra.mxu0 %v245
    %646 = vmatpush.bf16.msra.mxu0 %v243
    %647 = vmatmul.bf16.gmra.mxu0 %v624
    %v648 = vpop.f32.mrf.mxu0
    %v649 = vadd.f32 0.0, %v648
    %v650 = vpop.f32.mrf.mxu0
    %651 = vdwg.mxu0
    %v654 = vrot.slane %v636, 4
    %v655 = vrot.slane %v649, 4
    %v658 = vadd.f32 %v216, %v654
    %v659 = vadd.f32 %v217, %v655
    %v660 = vxor.u32 %v658, 2147483648
    %v661 = vxor.u32 %v659, 2147483648
    %v662 = vmul.f32 %v660, 1.442695
    %v663 = vpow.pop %v662
    %v664 = vmul.f32 %v661, 1.442695
    %v665 = vpow.pop %v664
    %v666 = vadd.f32 %v663, 1.0
    %v667 = vadd.f32 %v665, 1.0
    %v668 = vrcp.pop %v666
    %v669 = vmul.f32 %v666, %v668
    %v670 = vsub.f32 1.0, %v669
    %v671 = vmul.f32 %v668, %v670
    %v672 = vadd.f32 %v668, %v671
    %vm673 = vweird.f32 %v666
    %vm674 = vweird.f32 %v668
    %vm675 = vmor %vm673, %vm674
    %v676 = vsel %vm675, %v668, %v672
    %v677 = vand.u32 2147483647, %v666
    %vm678 = vcmp.eq.f32.partialorder %v677, 8.507059e+37
    %v679 = vand.u32 %v666, 2147483648
    %v680 = vor.u32 1.1754944e-38, %v679
    %v681 = vsel %vm678, %v680, %v676
    %v682 = vmul.f32 1.0, %v681
    %v683 = vrcp.pop %v667
    %v684 = vmul.f32 %v667, %v683
    %v685 = vsub.f32 1.0, %v684
    %v686 = vmul.f32 %v683, %v685
    %v687 = vadd.f32 %v683, %v686
    %vm688 = vweird.f32 %v667
    %vm689 = vweird.f32 %v683
    %vm690 = vmor %vm688, %vm689
    %v691 = vsel %vm690, %v683, %v687
    %v692 = vand.u32 2147483647, %v667
    %vm693 = vcmp.eq.f32.partialorder %v692, 8.507059e+37
    %v694 = vand.u32 %v667, 2147483648
    %v695 = vor.u32 1.1754944e-38, %v694
    %v696 = vsel %vm693, %v695, %v691
    %v697 = vmul.f32 1.0, %v696
    %v698 = vtanh.pop %v659
    %v700 = vrot.slane %v613, 7
    %v702 = vmul.f32 %v682, %v700
    %v703 = vmul.f32 %v682, %v698
    %705 = vrot.lane.b32.xlu0 %v703, 64
    %v706 = vpop.permute.xlu0 %705
    %v708 = vadd.f32 %v702, %v706
    %v709 = vtanh.pop %v708
    %v710 = vmul.f32 %v697, %v709
    %v711 = vpack.c.bf16 %v710, %v710
    %v713 = vrot.slane %v711, 2
    %714 = vrot.lane.b32.xlu0 %v713, 64
    %v715 = vpop.permute.xlu0 %714
    %v717 = vsel %vm109, %v715, 0
    %719 = vmatpush.bf16.msra.mxu0 0
    %720 = vmatpush.bf16.msra.mxu0 0
    %721 = vmatpush.bf16.msra.mxu0 0
    %722 = vmatpush.bf16.msra.mxu0 0
    %723 = vmatpush.bf16.msra.mxu0 %v248
    %724 = vmatpush.bf16.msra.mxu0 %v246
    %725 = vmatpush.bf16.msra.mxu0 %v244
    %726 = vmatpush.bf16.msra.mxu0 %v242
    %727 = vmatmul.bf16.gmra.mxu0 %v717
    %v728 = vpop.f32.mrf.mxu0
    %v729 = vadd.f32 0.0, %v728
    %v730 = vpop.f32.mrf.mxu0
    %731 = vdwg.mxu0
    %732 = vmatpush.bf16.msra.mxu0 0
    %733 = vmatpush.bf16.msra.mxu0 0
    %734 = vmatpush.bf16.msra.mxu0 0
    %735 = vmatpush.bf16.msra.mxu0 0
    %736 = vmatpush.bf16.msra.mxu0 %v249
    %737 = vmatpush.bf16.msra.mxu0 %v247
    %738 = vmatpush.bf16.msra.mxu0 %v245
    %739 = vmatpush.bf16.msra.mxu0 %v243
    %740 = vmatmul.bf16.gmra.mxu0 %v717
    %v741 = vpop.f32.mrf.mxu0
    %v742 = vadd.f32 0.0, %v741
    %v743 = vpop.f32.mrf.mxu0
    %744 = vdwg.mxu0
    %v747 = vrot.slane %v729, 3
    %v748 = vrot.slane %v742, 3
    %v751 = vadd.f32 %v216, %v747
    %v752 = vadd.f32 %v217, %v748
    %v753 = vxor.u32 %v751, 2147483648
    %v754 = vxor.u32 %v752, 2147483648
    %v755 = vmul.f32 %v753, 1.442695
    %v756 = vpow.pop %v755
    %v757 = vmul.f32 %v754, 1.442695
    %v758 = vpow.pop %v757
    %v759 = vadd.f32 %v756, 1.0
    %v760 = vadd.f32 %v758, 1.0
    %v761 = vrcp.pop %v759
    %v762 = vmul.f32 %v759, %v761
    %v763 = vsub.f32 1.0, %v762
    %v764 = vmul.f32 %v761, %v763
    %v765 = vadd.f32 %v761, %v764
    %vm766 = vweird.f32 %v759
    %vm767 = vweird.f32 %v761
    %vm768 = vmor %vm766, %vm767
    %v769 = vsel %vm768, %v761, %v765
    %v770 = vand.u32 2147483647, %v759
    %vm771 = vcmp.eq.f32.partialorder %v770, 8.507059e+37
    %v772 = vand.u32 %v759, 2147483648
    %v773 = vor.u32 1.1754944e-38, %v772
    %v774 = vsel %vm771, %v773, %v769
    %v775 = vmul.f32 1.0, %v774
    %v776 = vrcp.pop %v760
    %v777 = vmul.f32 %v760, %v776
    %v778 = vsub.f32 1.0, %v777
    %v779 = vmul.f32 %v776, %v778
    %v780 = vadd.f32 %v776, %v779
    %vm781 = vweird.f32 %v760
    %vm782 = vweird.f32 %v776
    %vm783 = vmor %vm781, %vm782
    %v784 = vsel %vm783, %v776, %v780
    %v785 = vand.u32 2147483647, %v760
    %vm786 = vcmp.eq.f32.partialorder %v785, 8.507059e+37
    %v787 = vand.u32 %v760, 2147483648
    %v788 = vor.u32 1.1754944e-38, %v787
    %v789 = vsel %vm786, %v788, %v784
    %v790 = vmul.f32 1.0, %v789
    %v791 = vtanh.pop %v752
    %v793 = vrot.slane %v708, 7
    %v795 = vmul.f32 %v775, %v793
    %v796 = vmul.f32 %v775, %v791
    %798 = vrot.lane.b32.xlu0 %v796, 64
    %v799 = vpop.permute.xlu0 %798
    %v801 = vadd.f32 %v795, %v799
    %v802 = vtanh.pop %v801
    %v803 = vmul.f32 %v790, %v802
    %v804 = vpack.c.bf16 %v803, %v803
    %v806 = vshrl.u32 %v804, 16
    %v808 = vrot.slane %v806, 2
    %809 = vrot.lane.b32.xlu0 %v808, 64
    %v810 = vpop.permute.xlu0 %809
    %v812 = vsel %vm109, %v810, 0
    %814 = vmatpush.bf16.msra.mxu0 0
    %815 = vmatpush.bf16.msra.mxu0 0
    %816 = vmatpush.bf16.msra.mxu0 0
    %817 = vmatpush.bf16.msra.mxu0 0
    %818 = vmatpush.bf16.msra.mxu0 %v248
    %819 = vmatpush.bf16.msra.mxu0 %v246
    %820 = vmatpush.bf16.msra.mxu0 %v244
    %821 = vmatpush.bf16.msra.mxu0 %v242
    %822 = vmatmul.bf16.gmra.mxu0 %v812
    %v823 = vpop.f32.mrf.mxu0
    %v824 = vadd.f32 0.0, %v823
    %v825 = vpop.f32.mrf.mxu0
    %826 = vdwg.mxu0
    %827 = vmatpush.bf16.msra.mxu0 0
    %828 = vmatpush.bf16.msra.mxu0 0
    %829 = vmatpush.bf16.msra.mxu0 0
    %830 = vmatpush.bf16.msra.mxu0 0
    %831 = vmatpush.bf16.msra.mxu0 %v249
    %832 = vmatpush.bf16.msra.mxu0 %v247
    %833 = vmatpush.bf16.msra.mxu0 %v245
    %834 = vmatpush.bf16.msra.mxu0 %v243
    %835 = vmatmul.bf16.gmra.mxu0 %v812
    %v836 = vpop.f32.mrf.mxu0
    %v837 = vadd.f32 0.0, %v836
    %v838 = vpop.f32.mrf.mxu0
    %839 = vdwg.mxu0
    %v842 = vrot.slane %v824, 2
    %v843 = vrot.slane %v837, 2
    %v846 = vadd.f32 %v216, %v842
    %v847 = vadd.f32 %v217, %v843
    %v848 = vxor.u32 %v846, 2147483648
    %v849 = vxor.u32 %v847, 2147483648
    %v850 = vmul.f32 %v848, 1.442695
    %v851 = vpow.pop %v850
    %v852 = vmul.f32 %v849, 1.442695
    %v853 = vpow.pop %v852
    %v854 = vadd.f32 %v851, 1.0
    %v855 = vadd.f32 %v853, 1.0
    %v856 = vrcp.pop %v854
    %v857 = vmul.f32 %v854, %v856
    %v858 = vsub.f32 1.0, %v857
    %v859 = vmul.f32 %v856, %v858
    %v860 = vadd.f32 %v856, %v859
    %vm861 = vweird.f32 %v854
    %vm862 = vweird.f32 %v856
    %vm863 = vmor %vm861, %vm862
    %v864 = vsel %vm863, %v856, %v860
    %v865 = vand.u32 2147483647, %v854
    %vm866 = vcmp.eq.f32.partialorder %v865, 8.507059e+37
    %v867 = vand.u32 %v854, 2147483648
    %v868 = vor.u32 1.1754944e-38, %v867
    %v869 = vsel %vm866, %v868, %v864
    %v870 = vmul.f32 1.0, %v869
    %v871 = vrcp.pop %v855
    %v872 = vmul.f32 %v855, %v871
    %v873 = vsub.f32 1.0, %v872
    %v874 = vmul.f32 %v871, %v873
    %v875 = vadd.f32 %v871, %v874
    %vm876 = vweird.f32 %v855
    %vm877 = vweird.f32 %v871
    %vm878 = vmor %vm876, %vm877
    %v879 = vsel %vm878, %v871, %v875
    %v880 = vand.u32 2147483647, %v855
    %vm881 = vcmp.eq.f32.partialorder %v880, 8.507059e+37
    %v882 = vand.u32 %v855, 2147483648
    %v883 = vor.u32 1.1754944e-38, %v882
    %v884 = vsel %vm881, %v883, %v879
    %v885 = vmul.f32 1.0, %v884
    %v886 = vtanh.pop %v847
    %v888 = vrot.slane %v801, 7
    %v890 = vmul.f32 %v870, %v888
    %v891 = vmul.f32 %v870, %v886
    %893 = vrot.lane.b32.xlu0 %v891, 64
    %v894 = vpop.permute.xlu0 %893
    %v896 = vadd.f32 %v890, %v894
    %v897 = vtanh.pop %v896
    %v898 = vmul.f32 %v885, %v897
    %v899 = vpack.c.bf16 %v898, %v898
    %v901 = vrot.slane %v899, 3
    %902 = vrot.lane.b32.xlu0 %v901, 64
    %v903 = vpop.permute.xlu0 %902
    %v905 = vsel %vm109, %v903, 0
    %907 = vmatpush.bf16.msra.mxu0 0
    %908 = vmatpush.bf16.msra.mxu0 0
    %909 = vmatpush.bf16.msra.mxu0 0
    %910 = vmatpush.bf16.msra.mxu0 0
    %911 = vmatpush.bf16.msra.mxu0 %v248
    %912 = vmatpush.bf16.msra.mxu0 %v246
    %913 = vmatpush.bf16.msra.mxu0 %v244
    %914 = vmatpush.bf16.msra.mxu0 %v242
    %915 = vmatmul.bf16.gmra.mxu0 %v905
    %v916 = vpop.f32.mrf.mxu0
    %v917 = vadd.f32 0.0, %v916
    %v918 = vpop.f32.mrf.mxu0
    %919 = vdwg.mxu0
    %920 = vmatpush.bf16.msra.mxu0 0
    %921 = vmatpush.bf16.msra.mxu0 0
    %922 = vmatpush.bf16.msra.mxu0 0
    %923 = vmatpush.bf16.msra.mxu0 0
    %924 = vmatpush.bf16.msra.mxu0 %v249
    %925 = vmatpush.bf16.msra.mxu0 %v247
    %926 = vmatpush.bf16.msra.mxu0 %v245
    %927 = vmatpush.bf16.msra.mxu0 %v243
    %928 = vmatmul.bf16.gmra.mxu0 %v905
    %v929 = vpop.f32.mrf.mxu0
    %v930 = vadd.f32 0.0, %v929
    %v931 = vpop.f32.mrf.mxu0
    %932 = vdwg.mxu0
    %v935 = vrot.slane %v917, 1
    %v936 = vrot.slane %v930, 1
    %v939 = vadd.f32 %v216, %v935
    %v940 = vadd.f32 %v217, %v936
    %v941 = vxor.u32 %v939, 2147483648
    %v942 = vxor.u32 %v940, 2147483648
    %v943 = vmul.f32 %v941, 1.442695
    %v944 = vpow.pop %v943
    %v945 = vmul.f32 %v942, 1.442695
    %v946 = vpow.pop %v945
    %v947 = vadd.f32 %v944, 1.0
    %v948 = vadd.f32 %v946, 1.0
    %v949 = vrcp.pop %v947
    %v950 = vmul.f32 %v947, %v949
    %v951 = vsub.f32 1.0, %v950
    %v952 = vmul.f32 %v949, %v951
    %v953 = vadd.f32 %v949, %v952
    %vm954 = vweird.f32 %v947
    %vm955 = vweird.f32 %v949
    %vm956 = vmor %vm954, %vm955
    %v957 = vsel %vm956, %v949, %v953
    %v958 = vand.u32 2147483647, %v947
    %vm959 = vcmp.eq.f32.partialorder %v958, 8.507059e+37
    %v960 = vand.u32 %v947, 2147483648
    %v961 = vor.u32 1.1754944e-38, %v960
    %v962 = vsel %vm959, %v961, %v957
    %v963 = vmul.f32 1.0, %v962
    %v964 = vrcp.pop %v948
    %v965 = vmul.f32 %v948, %v964
    %v966 = vsub.f32 1.0, %v965
    %v967 = vmul.f32 %v964, %v966
    %v968 = vadd.f32 %v964, %v967
    %vm969 = vweird.f32 %v948
    %vm970 = vweird.f32 %v964
    %vm971 = vmor %vm969, %vm970
    %v972 = vsel %vm971, %v964, %v968
    %v973 = vand.u32 2147483647, %v948
    %vm974 = vcmp.eq.f32.partialorder %v973, 8.507059e+37
    %v975 = vand.u32 %v948, 2147483648
    %v976 = vor.u32 1.1754944e-38, %v975
    %v977 = vsel %vm974, %v976, %v972
    %v978 = vmul.f32 1.0, %v977
    %v979 = vtanh.pop %v940
    %v981 = vrot.slane %v896, 7
    %v983 = vmul.f32 %v963, %v981
    %v984 = vmul.f32 %v963, %v979
    %986 = vrot.lane.b32.xlu0 %v984, 64
    %v987 = vpop.permute.xlu0 %986
    %v989 = vadd.f32 %v983, %v987
    %v990 = vtanh.pop %v989
    %v991 = vmul.f32 %v978, %v990
    %vm992 = vcmp.lt.s32.totalorder %v188, 32
    %v993 = vsel %vm166, %v336, %v428
    %v994 = vsel %vm169, %v993, %v522
    %v995 = vsel %vm172, %v994, %v615
    %v996 = vsel %vm175, %v995, %v710
    %v997 = vsel %vm178, %v996, %v803
    %v998 = vsel %vm181, %v997, %v898
    %v999 = vsel %vm184, %v998, %v991
    %v1001 = vrot.slane %v991, 7
    %v1004 = vrot.slane %v898, 5
    %v1007 = vrot.slane %v803, 3
    %v1010 = vrot.slane %v710, 1
    %v1013 = vrot.slane %v615, 7
    %v1016 = vrot.slane %v522, 5
    %v1019 = vrot.slane %v428, 3
    %v1022 = vrot.slane %v336, 1
    %v1024 = vsel %vm166, %v1001, %v1004
    %v1025 = vsel %vm169, %v1024, %v1007
    %v1026 = vsel %vm172, %v1025, %v1010
    %v1027 = vsel %vm175, %v1026, %v1013
    %v1028 = vsel %vm178, %v1027, %v1016
    %v1029 = vsel %vm181, %v1028, %v1019
    %v1030 = vsel %vm184, %v1029, %v1022
    %1032 = vrot.lane.b32.xlu0 %v999, 64
    %v1033 = vpop.permute.xlu0 %1032
    %1036 = vrot.lane.b32.xlu0 %v1030, 64
    %v1037 = vpop.permute.xlu0 %1036
    %v1039 = vsel %vm992, %v1033, %v1037
    %v1040 = vpack.c.bf16 %v1039, %v1039
    %s1041 = scalar_lea.vmem [#allocation2], 128
    %v1042 = vld [vmem:[%s1041] sm:$0xff]
    %v1043 = vld [vmem:[%s1041 + $0x8] sm:$0xff]
    %v1044 = vld [vmem:[%s1041 + $0x10] sm:$0xff]
    %v1045 = vld [vmem:[%s1041 + $0x18] sm:$0xff]
    %v1046 = vld [vmem:[%s1041 + $0x20] sm:$0xff]
    %v1047 = vld [vmem:[%s1041 + $0x28] sm:$0xff]
    %v1048 = vld [vmem:[%s1041 + $0x30] sm:$0xff]
    %v1049 = vld [vmem:[%s1041 + $0x38] sm:$0xff]
    %v1051 = vperm.slane %v53, 0
    %v1052 = vperm.slane %v53, 1
    %v1063 = vunpack.c.l.b16 %v1042
    %v1064 = vunpack.c.h.b16 %v1042
    %v1065 = vunpack.c.l.b16 %v1043
    %v1066 = vunpack.c.h.b16 %v1043
    %v1067 = vunpack.c.l.b16 %v1044
    %v1068 = vunpack.c.h.b16 %v1044
    %v1069 = vunpack.c.l.b16 %v1045
    %v1070 = vunpack.c.h.b16 %v1045
    %v1071 = vunpack.c.l.b16 %v1046
    %v1072 = vunpack.c.h.b16 %v1046
    %v1073 = vunpack.c.l.b16 %v1047
    %v1074 = vunpack.c.h.b16 %v1047
    %v1075 = vunpack.c.l.b16 %v1048
    %v1076 = vunpack.c.h.b16 %v1048
    %v1077 = vunpack.c.l.b16 %v1049
    %v1078 = vunpack.c.h.b16 %v1049
    %v1079 = vpack.c.b16 %v1065, %v1063
    %v1080 = vpack.c.b16 %v1066, %v1064
    %v1081 = vpack.c.b16 %v1069, %v1067
    %v1082 = vpack.c.b16 %v1070, %v1068
    %v1083 = vpack.c.b16 %v1073, %v1071
    %v1084 = vpack.c.b16 %v1074, %v1072
    %v1085 = vpack.c.b16 %v1077, %v1075
    %v1086 = vpack.c.b16 %v1078, %v1076
    %v1096 = vsel %vm109, %v1040, 0
    %1098 = vmatpush.bf16.msra.mxu0 0
    %1099 = vmatpush.bf16.msra.mxu0 0
    %1100 = vmatpush.bf16.msra.mxu0 0
    %1101 = vmatpush.bf16.msra.mxu0 0
    %1102 = vmatpush.bf16.msra.mxu0 %v1085
    %1103 = vmatpush.bf16.msra.mxu0 %v1083
    %1104 = vmatpush.bf16.msra.mxu0 %v1081
    %1105 = vmatpush.bf16.msra.mxu0 %v1079
    %1106 = vmatmul.bf16.gmra.mxu0 %v1096
    %v1107 = vpop.f32.mrf.mxu0
    %v1108 = vadd.f32 %v1051, %v1107
    %v1109 = vpop.f32.mrf.mxu0
    %1110 = vdwg.mxu0
    %1111 = vmatpush.bf16.msra.mxu0 0
    %1112 = vmatpush.bf16.msra.mxu0 0
    %1113 = vmatpush.bf16.msra.mxu0 0
    %1114 = vmatpush.bf16.msra.mxu0 0
    %1115 = vmatpush.bf16.msra.mxu0 %v1086
    %1116 = vmatpush.bf16.msra.mxu0 %v1084
    %1117 = vmatpush.bf16.msra.mxu0 %v1082
    %1118 = vmatpush.bf16.msra.mxu0 %v1080
    %1119 = vmatmul.bf16.gmra.mxu0 %v1096
    %v1120 = vpop.f32.mrf.mxu0
    %v1121 = vadd.f32 %v1052, %v1120
    %v1122 = vpop.f32.mrf.mxu0
    %1123 = vdwg.mxu0
    %s1124 = scalar_lea.vmem [#allocation2], 192
    %v1125 = vld [vmem:[%s1124] sm:$0xff]
    %v1126 = vld [vmem:[%s1124 + $0x8] sm:$0xff]
    %v1127 = vld [vmem:[%s1124 + $0x10] sm:$0xff]
    %v1128 = vld [vmem:[%s1124 + $0x18] sm:$0xff]
    %v1129 = vld [vmem:[%s1124 + $0x20] sm:$0xff]
    %v1130 = vld [vmem:[%s1124 + $0x28] sm:$0xff]
    %v1131 = vld [vmem:[%s1124 + $0x30] sm:$0xff]
    %v1132 = vld [vmem:[%s1124 + $0x38] sm:$0xff]
    %v1135 = vrot.slane %v1108, 7
    %v1136 = vrot.slane %v1121, 7
    %v1139 = vrot.slane %v1108, 5
    %v1140 = vrot.slane %v1121, 5
    %v1143 = vrot.slane %v1108, 3
    %v1144 = vrot.slane %v1121, 3
    %v1147 = vrot.slane %v1108, 1
    %v1148 = vrot.slane %v1121, 1
    %v1151 = vsel %vm166, %v1135, %v1139
    %v1152 = vsel %vm166, %v1136, %v1140
    %v1153 = vsel %vm169, %v1151, %v1143
    %v1154 = vsel %vm169, %v1152, %v1144
    %v1155 = vsel %vm172, %v1153, %v1147
    %v1156 = vsel %vm172, %v1154, %v1148
    %v1157 = vsel %vm175, %v1155, %v1135
    %v1158 = vsel %vm175, %v1156, %v1136
    %v1159 = vsel %vm178, %v1157, %v1139
    %v1160 = vsel %vm178, %v1158, %v1140
    %v1161 = vsel %vm181, %v1159, %v1143
    %v1162 = vsel %vm181, %v1160, %v1144
    %v1163 = vsel %vm184, %v1161, %v1147
    %v1164 = vsel %vm184, %v1162, %v1148
    %v1165 = vsel %vm214, %v1108, %v1163
    %v1166 = vsel %vm215, %v1121, %v1164
    %v1175 = vunpack.c.l.b16 %v1125
    %v1176 = vunpack.c.h.b16 %v1125
    %v1177 = vunpack.c.l.b16 %v1126
    %v1178 = vunpack.c.h.b16 %v1126
    %v1179 = vunpack.c.l.b16 %v1127
    %v1180 = vunpack.c.h.b16 %v1127
    %v1181 = vunpack.c.l.b16 %v1128
    %v1182 = vunpack.c.h.b16 %v1128
    %v1183 = vunpack.c.l.b16 %v1129
    %v1184 = vunpack.c.h.b16 %v1129
    %v1185 = vunpack.c.l.b16 %v1130
    %v1186 = vunpack.c.h.b16 %v1130
    %v1187 = vunpack.c.l.b16 %v1131
    %v1188 = vunpack.c.h.b16 %v1131
    %v1189 = vunpack.c.l.b16 %v1132
    %v1190 = vunpack.c.h.b16 %v1132
    %v1191 = vpack.c.b16 %v1177, %v1175
    %v1192 = vpack.c.b16 %v1178, %v1176
    %v1193 = vpack.c.b16 %v1181, %v1179
    %v1194 = vpack.c.b16 %v1182, %v1180
    %v1195 = vpack.c.b16 %v1185, %v1183
    %v1196 = vpack.c.b16 %v1186, %v1184
    %v1197 = vpack.c.b16 %v1189, %v1187
    %v1198 = vpack.c.b16 %v1190, %v1188
    %1207 = vmatpush.bf16.msra.mxu0 0
    %1208 = vmatpush.bf16.msra.mxu0 0
    %1209 = vmatpush.bf16.msra.mxu0 0
    %1210 = vmatpush.bf16.msra.mxu0 0
    %1211 = vmatpush.bf16.msra.mxu0 %v1197
    %1212 = vmatpush.bf16.msra.mxu0 %v1195
    %1213 = vmatpush.bf16.msra.mxu0 %v1193
    %1214 = vmatpush.bf16.msra.mxu0 %v1191
    %1215 = vmatmul.bf16.gmra.mxu0 %v259
    %v1216 = vpop.f32.mrf.mxu0
    %v1217 = vadd.f32 0.0, %v1216
    %v1218 = vpop.f32.mrf.mxu0
    %1219 = vdwg.mxu0
    %1220 = vmatpush.bf16.msra.mxu0 0
    %1221 = vmatpush.bf16.msra.mxu0 0
    %1222 = vmatpush.bf16.msra.mxu0 0
    %1223 = vmatpush.bf16.msra.mxu0 0
    %1224 = vmatpush.bf16.msra.mxu0 %v1198
    %1225 = vmatpush.bf16.msra.mxu0 %v1196
    %1226 = vmatpush.bf16.msra.mxu0 %v1194
    %1227 = vmatpush.bf16.msra.mxu0 %v1192
    %1228 = vmatmul.bf16.gmra.mxu0 %v259
    %v1229 = vpop.f32.mrf.mxu0
    %v1230 = vadd.f32 0.0, %v1229
    %v1231 = vpop.f32.mrf.mxu0
    %1232 = vdwg.mxu0
    %v1233 = vadd.f32 %v1165, %v1217
    %v1234 = vadd.f32 %v1166, %v1230
    %v1235 = vxor.u32 %v1233, 2147483648
    %v1236 = vxor.u32 %v1234, 2147483648
    %v1237 = vmul.f32 %v1235, 1.442695
    %v1238 = vpow.pop %v1237
    %v1239 = vmul.f32 %v1236, 1.442695
    %v1240 = vpow.pop %v1239
    %v1241 = vadd.f32 %v1238, 1.0
    %v1242 = vadd.f32 %v1240, 1.0
    %v1243 = vrcp.pop %v1241
    %v1244 = vmul.f32 %v1241, %v1243
    %v1245 = vsub.f32 1.0, %v1244
    %v1246 = vmul.f32 %v1243, %v1245
    %v1247 = vadd.f32 %v1243, %v1246
    %vm1248 = vweird.f32 %v1241
    %vm1249 = vweird.f32 %v1243
    %vm1250 = vmor %vm1248, %vm1249
    %v1251 = vsel %vm1250, %v1243, %v1247
    %v1252 = vand.u32 2147483647, %v1241
    %vm1253 = vcmp.eq.f32.partialorder %v1252, 8.507059e+37
    %v1254 = vand.u32 %v1241, 2147483648
    %v1255 = vor.u32 1.1754944e-38, %v1254
    %v1256 = vsel %vm1253, %v1255, %v1251
    %v1257 = vmul.f32 1.0, %v1256
    %v1258 = vrcp.pop %v1242
    %v1259 = vmul.f32 %v1242, %v1258
    %v1260 = vsub.f32 1.0, %v1259
    %v1261 = vmul.f32 %v1258, %v1260
    %v1262 = vadd.f32 %v1258, %v1261
    %vm1263 = vweird.f32 %v1242
    %vm1264 = vweird.f32 %v1258
    %vm1265 = vmor %vm1263, %vm1264
    %v1266 = vsel %vm1265, %v1258, %v1262
    %v1267 = vand.u32 2147483647, %v1242
    %vm1268 = vcmp.eq.f32.partialorder %v1267, 8.507059e+37
    %v1269 = vand.u32 %v1242, 2147483648
    %v1270 = vor.u32 1.1754944e-38, %v1269
    %v1271 = vsel %vm1268, %v1270, %v1266
    %v1272 = vmul.f32 1.0, %v1271
    %v1273 = vtanh.pop %v1234
    %v1274 = vmul.f32 %v1257, 0.0
    %v1275 = vmul.f32 %v1257, %v1273
    %1277 = vrot.lane.b32.xlu0 %v1275, 64
    %v1278 = vpop.permute.xlu0 %1277
    %v1280 = vadd.f32 %v1274, %v1278
    %v1281 = vtanh.pop %v1280
    %v1282 = vmul.f32 %v1272, %v1281
    %v1283 = vpack.c.bf16 %v1282, %v1282
    %1285 = vrot.lane.b32.xlu0 %v1283, 64
    %v1286 = vpop.permute.xlu0 %1285
    %v1288 = vsel %vm109, %v1286, 0
    %1290 = vmatpush.bf16.msra.mxu0 0
    %1291 = vmatpush.bf16.msra.mxu0 0
    %1292 = vmatpush.bf16.msra.mxu0 0
    %1293 = vmatpush.bf16.msra.mxu0 0
    %1294 = vmatpush.bf16.msra.mxu0 %v1197
    %1295 = vmatpush.bf16.msra.mxu0 %v1195
    %1296 = vmatpush.bf16.msra.mxu0 %v1193
    %1297 = vmatpush.bf16.msra.mxu0 %v1191
    %1298 = vmatmul.bf16.gmra.mxu0 %v1288
    %v1299 = vpop.f32.mrf.mxu0
    %v1300 = vadd.f32 0.0, %v1299
    %v1301 = vpop.f32.mrf.mxu0
    %1302 = vdwg.mxu0
    %1303 = vmatpush.bf16.msra.mxu0 0
    %1304 = vmatpush.bf16.msra.mxu0 0
    %1305 = vmatpush.bf16.msra.mxu0 0
    %1306 = vmatpush.bf16.msra.mxu0 0
    %1307 = vmatpush.bf16.msra.mxu0 %v1198
    %1308 = vmatpush.bf16.msra.mxu0 %v1196
    %1309 = vmatpush.bf16.msra.mxu0 %v1194
    %1310 = vmatpush.bf16.msra.mxu0 %v1192
    %1311 = vmatmul.bf16.gmra.mxu0 %v1288
    %v1312 = vpop.f32.mrf.mxu0
    %v1313 = vadd.f32 0.0, %v1312
    %v1314 = vpop.f32.mrf.mxu0
    %1315 = vdwg.mxu0
    %v1318 = vrot.slane %v1300, 7
    %v1319 = vrot.slane %v1313, 7
    %v1322 = vadd.f32 %v1165, %v1318
    %v1323 = vadd.f32 %v1166, %v1319
    %v1324 = vxor.u32 %v1322, 2147483648
    %v1325 = vxor.u32 %v1323, 2147483648
    %v1326 = vmul.f32 %v1324, 1.442695
    %v1327 = vpow.pop %v1326
    %v1328 = vmul.f32 %v1325, 1.442695
    %v1329 = vpow.pop %v1328
    %v1330 = vadd.f32 %v1327, 1.0
    %v1331 = vadd.f32 %v1329, 1.0
    %v1332 = vrcp.pop %v1330
    %v1333 = vmul.f32 %v1330, %v1332
    %v1334 = vsub.f32 1.0, %v1333
    %v1335 = vmul.f32 %v1332, %v1334
    %v1336 = vadd.f32 %v1332, %v1335
    %vm1337 = vweird.f32 %v1330
    %vm1338 = vweird.f32 %v1332
    %vm1339 = vmor %vm1337, %vm1338
    %v1340 = vsel %vm1339, %v1332, %v1336
    %v1341 = vand.u32 2147483647, %v1330
    %vm1342 = vcmp.eq.f32.partialorder %v1341, 8.507059e+37
    %v1343 = vand.u32 %v1330, 2147483648
    %v1344 = vor.u32 1.1754944e-38, %v1343
    %v1345 = vsel %vm1342, %v1344, %v1340
    %v1346 = vmul.f32 1.0, %v1345
    %v1347 = vrcp.pop %v1331
    %v1348 = vmul.f32 %v1331, %v1347
    %v1349 = vsub.f32 1.0, %v1348
    %v1350 = vmul.f32 %v1347, %v1349
    %v1351 = vadd.f32 %v1347, %v1350
    %vm1352 = vweird.f32 %v1331
    %vm1353 = vweird.f32 %v1347
    %vm1354 = vmor %vm1352, %vm1353
    %v1355 = vsel %vm1354, %v1347, %v1351
    %v1356 = vand.u32 2147483647, %v1331
    %vm1357 = vcmp.eq.f32.partialorder %v1356, 8.507059e+37
    %v1358 = vand.u32 %v1331, 2147483648
    %v1359 = vor.u32 1.1754944e-38, %v1358
    %v1360 = vsel %vm1357, %v1359, %v1355
    %v1361 = vmul.f32 1.0, %v1360
    %v1362 = vtanh.pop %v1323
    %v1364 = vrot.slane %v1280, 7
    %v1366 = vmul.f32 %v1346, %v1364
    %v1367 = vmul.f32 %v1346, %v1362
    %1369 = vrot.lane.b32.xlu0 %v1367, 64
    %v1370 = vpop.permute.xlu0 %1369
    %v1372 = vadd.f32 %v1366, %v1370
    %v1373 = vtanh.pop %v1372
    %v1374 = vmul.f32 %v1361, %v1373
    %v1375 = vpack.c.bf16 %v1374, %v1374
    %v1377 = vshrl.u32 %v1375, 16
    %1379 = vrot.lane.b32.xlu0 %v1377, 64
    %v1380 = vpop.permute.xlu0 %1379
    %v1382 = vsel %vm109, %v1380, 0
    %1384 = vmatpush.bf16.msra.mxu0 0
    %1385 = vmatpush.bf16.msra.mxu0 0
    %1386 = vmatpush.bf16.msra.mxu0 0
    %1387 = vmatpush.bf16.msra.mxu0 0
    %1388 = vmatpush.bf16.msra.mxu0 %v1197
    %1389 = vmatpush.bf16.msra.mxu0 %v1195
    %1390 = vmatpush.bf16.msra.mxu0 %v1193
    %1391 = vmatpush.bf16.msra.mxu0 %v1191
    %1392 = vmatmul.bf16.gmra.mxu0 %v1382
    %v1393 = vpop.f32.mrf.mxu0
    %v1394 = vadd.f32 0.0, %v1393
    %v1395 = vpop.f32.mrf.mxu0
    %1396 = vdwg.mxu0
    %1397 = vmatpush.bf16.msra.mxu0 0
    %1398 = vmatpush.bf16.msra.mxu0 0
    %1399 = vmatpush.bf16.msra.mxu0 0
    %1400 = vmatpush.bf16.msra.mxu0 0
    %1401 = vmatpush.bf16.msra.mxu0 %v1198
    %1402 = vmatpush.bf16.msra.mxu0 %v1196
    %1403 = vmatpush.bf16.msra.mxu0 %v1194
    %1404 = vmatpush.bf16.msra.mxu0 %v1192
    %1405 = vmatmul.bf16.gmra.mxu0 %v1382
    %v1406 = vpop.f32.mrf.mxu0
    %v1407 = vadd.f32 0.0, %v1406
    %v1408 = vpop.f32.mrf.mxu0
    %1409 = vdwg.mxu0
    %v1412 = vrot.slane %v1394, 6
    %v1413 = vrot.slane %v1407, 6
    %v1416 = vadd.f32 %v1165, %v1412
    %v1417 = vadd.f32 %v1166, %v1413
    %v1418 = vxor.u32 %v1416, 2147483648
    %v1419 = vxor.u32 %v1417, 2147483648
    %v1420 = vmul.f32 %v1418, 1.442695
    %v1421 = vpow.pop %v1420
    %v1422 = vmul.f32 %v1419, 1.442695
    %v1423 = vpow.pop %v1422
    %v1424 = vadd.f32 %v1421, 1.0
    %v1425 = vadd.f32 %v1423, 1.0
    %v1426 = vrcp.pop %v1424
    %v1427 = vmul.f32 %v1424, %v1426
    %v1428 = vsub.f32 1.0, %v1427
    %v1429 = vmul.f32 %v1426, %v1428
    %v1430 = vadd.f32 %v1426, %v1429
    %vm1431 = vweird.f32 %v1424
    %vm1432 = vweird.f32 %v1426
    %vm1433 = vmor %vm1431, %vm1432
    %v1434 = vsel %vm1433, %v1426, %v1430
    %v1435 = vand.u32 2147483647, %v1424
    %vm1436 = vcmp.eq.f32.partialorder %v1435, 8.507059e+37
    %v1437 = vand.u32 %v1424, 2147483648
    %v1438 = vor.u32 1.1754944e-38, %v1437
    %v1439 = vsel %vm1436, %v1438, %v1434
    %v1440 = vmul.f32 1.0, %v1439
    %v1441 = vrcp.pop %v1425
    %v1442 = vmul.f32 %v1425, %v1441
    %v1443 = vsub.f32 1.0, %v1442
    %v1444 = vmul.f32 %v1441, %v1443
    %v1445 = vadd.f32 %v1441, %v1444
    %vm1446 = vweird.f32 %v1425
    %vm1447 = vweird.f32 %v1441
    %vm1448 = vmor %vm1446, %vm1447
    %v1449 = vsel %vm1448, %v1441, %v1445
    %v1450 = vand.u32 2147483647, %v1425
    %vm1451 = vcmp.eq.f32.partialorder %v1450, 8.507059e+37
    %v1452 = vand.u32 %v1425, 2147483648
    %v1453 = vor.u32 1.1754944e-38, %v1452
    %v1454 = vsel %vm1451, %v1453, %v1449
    %v1455 = vmul.f32 1.0, %v1454
    %v1456 = vtanh.pop %v1417
    %v1458 = vrot.slane %v1372, 7
    %v1460 = vmul.f32 %v1440, %v1458
    %v1461 = vmul.f32 %v1440, %v1456
    %1463 = vrot.lane.b32.xlu0 %v1461, 64
    %v1464 = vpop.permute.xlu0 %1463
    %v1466 = vadd.f32 %v1460, %v1464
    %v1467 = vtanh.pop %v1466
    %v1468 = vmul.f32 %v1455, %v1467
    %v1469 = vpack.c.bf16 %v1468, %v1468
    %v1471 = vrot.slane %v1469, 1
    %1472 = vrot.lane.b32.xlu0 %v1471, 64
    %v1473 = vpop.permute.xlu0 %1472
    %v1475 = vsel %vm109, %v1473, 0
    %1477 = vmatpush.bf16.msra.mxu0 0
    %1478 = vmatpush.bf16.msra.mxu0 0
    %1479 = vmatpush.bf16.msra.mxu0 0
    %1480 = vmatpush.bf16.msra.mxu0 0
    %1481 = vmatpush.bf16.msra.mxu0 %v1197
    %1482 = vmatpush.bf16.msra.mxu0 %v1195
    %1483 = vmatpush.bf16.msra.mxu0 %v1193
    %1484 = vmatpush.bf16.msra.mxu0 %v1191
    %1485 = vmatmul.bf16.gmra.mxu0 %v1475
    %v1486 = vpop.f32.mrf.mxu0
    %v1487 = vadd.f32 0.0, %v1486
    %v1488 = vpop.f32.mrf.mxu0
    %1489 = vdwg.mxu0
    %1490 = vmatpush.bf16.msra.mxu0 0
    %1491 = vmatpush.bf16.msra.mxu0 0
    %1492 = vmatpush.bf16.msra.mxu0 0
    %1493 = vmatpush.bf16.msra.mxu0 0
    %1494 = vmatpush.bf16.msra.mxu0 %v1198
    %1495 = vmatpush.bf16.msra.mxu0 %v1196
    %1496 = vmatpush.bf16.msra.mxu0 %v1194
    %1497 = vmatpush.bf16.msra.mxu0 %v1192
    %1498 = vmatmul.bf16.gmra.mxu0 %v1475
    %v1499 = vpop.f32.mrf.mxu0
    %v1500 = vadd.f32 0.0, %v1499
    %v1501 = vpop.f32.mrf.mxu0
    %1502 = vdwg.mxu0
    %v1505 = vrot.slane %v1487, 5
    %v1506 = vrot.slane %v1500, 5
    %v1509 = vadd.f32 %v1165, %v1505
    %v1510 = vadd.f32 %v1166, %v1506
    %v1511 = vxor.u32 %v1509, 2147483648
    %v1512 = vxor.u32 %v1510, 2147483648
    %v1513 = vmul.f32 %v1511, 1.442695
    %v1514 = vpow.pop %v1513
    %v1515 = vmul.f32 %v1512, 1.442695
    %v1516 = vpow.pop %v1515
    %v1517 = vadd.f32 %v1514, 1.0
    %v1518 = vadd.f32 %v1516, 1.0
    %v1519 = vrcp.pop %v1517
    %v1520 = vmul.f32 %v1517, %v1519
    %v1521 = vsub.f32 1.0, %v1520
    %v1522 = vmul.f32 %v1519, %v1521
    %v1523 = vadd.f32 %v1519, %v1522
    %vm1524 = vweird.f32 %v1517
    %vm1525 = vweird.f32 %v1519
    %vm1526 = vmor %vm1524, %vm1525
    %v1527 = vsel %vm1526, %v1519, %v1523
    %v1528 = vand.u32 2147483647, %v1517
    %vm1529 = vcmp.eq.f32.partialorder %v1528, 8.507059e+37
    %v1530 = vand.u32 %v1517, 2147483648
    %v1531 = vor.u32 1.1754944e-38, %v1530
    %v1532 = vsel %vm1529, %v1531, %v1527
    %v1533 = vmul.f32 1.0, %v1532
    %v1534 = vrcp.pop %v1518
    %v1535 = vmul.f32 %v1518, %v1534
    %v1536 = vsub.f32 1.0, %v1535
    %v1537 = vmul.f32 %v1534, %v1536
    %v1538 = vadd.f32 %v1534, %v1537
    %vm1539 = vweird.f32 %v1518
    %vm1540 = vweird.f32 %v1534
    %vm1541 = vmor %vm1539, %vm1540
    %v1542 = vsel %vm1541, %v1534, %v1538
    %v1543 = vand.u32 2147483647, %v1518
    %vm1544 = vcmp.eq.f32.partialorder %v1543, 8.507059e+37
    %v1545 = vand.u32 %v1518, 2147483648
    %v1546 = vor.u32 1.1754944e-38, %v1545
    %v1547 = vsel %vm1544, %v1546, %v1542
    %v1548 = vmul.f32 1.0, %v1547
    %v1549 = vtanh.pop %v1510
    %v1551 = vrot.slane %v1466, 7
    %v1553 = vmul.f32 %v1533, %v1551
    %v1554 = vmul.f32 %v1533, %v1549
    %1556 = vrot.lane.b32.xlu0 %v1554, 64
    %v1557 = vpop.permute.xlu0 %1556
    %v1559 = vadd.f32 %v1553, %v1557
    %v1560 = vtanh.pop %v1559
    %v1561 = vmul.f32 %v1548, %v1560
    %v1562 = vpack.c.bf16 %v1561, %v1561
    %v1564 = vshrl.u32 %v1562, 16
    %v1566 = vrot.slane %v1564, 1
    %1567 = vrot.lane.b32.xlu0 %v1566, 64
    %v1568 = vpop.permute.xlu0 %1567
    %v1570 = vsel %vm109, %v1568, 0
    %1572 = vmatpush.bf16.msra.mxu0 0
    %1573 = vmatpush.bf16.msra.mxu0 0
    %1574 = vmatpush.bf16.msra.mxu0 0
    %1575 = vmatpush.bf16.msra.mxu0 0
    %1576 = vmatpush.bf16.msra.mxu0 %v1197
    %1577 = vmatpush.bf16.msra.mxu0 %v1195
    %1578 = vmatpush.bf16.msra.mxu0 %v1193
    %1579 = vmatpush.bf16.msra.mxu0 %v1191
    %1580 = vmatmul.bf16.gmra.mxu0 %v1570
    %v1581 = vpop.f32.mrf.mxu0
    %v1582 = vadd.f32 0.0, %v1581
    %v1583 = vpop.f32.mrf.mxu0
    %1584 = vdwg.mxu0
    %1585 = vmatpush.bf16.msra.mxu0 0
    %1586 = vmatpush.bf16.msra.mxu0 0
    %1587 = vmatpush.bf16.msra.mxu0 0
    %1588 = vmatpush.bf16.msra.mxu0 0
    %1589 = vmatpush.bf16.msra.mxu0 %v1198
    %1590 = vmatpush.bf16.msra.mxu0 %v1196
    %1591 = vmatpush.bf16.msra.mxu0 %v1194
    %1592 = vmatpush.bf16.msra.mxu0 %v1192
    %1593 = vmatmul.bf16.gmra.mxu0 %v1570
    %v1594 = vpop.f32.mrf.mxu0
    %v1595 = vadd.f32 0.0, %v1594
    %v1596 = vpop.f32.mrf.mxu0
    %1597 = vdwg.mxu0
    %v1600 = vrot.slane %v1582, 4
    %v1601 = vrot.slane %v1595, 4
    %v1604 = vadd.f32 %v1165, %v1600
    %v1605 = vadd.f32 %v1166, %v1601
    %v1606 = vxor.u32 %v1604, 2147483648
    %v1607 = vxor.u32 %v1605, 2147483648
    %v1608 = vmul.f32 %v1606, 1.442695
    %v1609 = vpow.pop %v1608
    %v1610 = vmul.f32 %v1607, 1.442695
    %v1611 = vpow.pop %v1610
    %v1612 = vadd.f32 %v1609, 1.0
    %v1613 = vadd.f32 %v1611, 1.0
    %v1614 = vrcp.pop %v1612
    %v1615 = vmul.f32 %v1612, %v1614
    %v1616 = vsub.f32 1.0, %v1615
    %v1617 = vmul.f32 %v1614, %v1616
    %v1618 = vadd.f32 %v1614, %v1617
    %vm1619 = vweird.f32 %v1612
    %vm1620 = vweird.f32 %v1614
    %vm1621 = vmor %vm1619, %vm1620
    %v1622 = vsel %vm1621, %v1614, %v1618
    %v1623 = vand.u32 2147483647, %v1612
    %vm1624 = vcmp.eq.f32.partialorder %v1623, 8.507059e+37
    %v1625 = vand.u32 %v1612, 2147483648
    %v1626 = vor.u32 1.1754944e-38, %v1625
    %v1627 = vsel %vm1624, %v1626, %v1622
    %v1628 = vmul.f32 1.0, %v1627
    %v1629 = vrcp.pop %v1613
    %v1630 = vmul.f32 %v1613, %v1629
    %v1631 = vsub.f32 1.0, %v1630
    %v1632 = vmul.f32 %v1629, %v1631
    %v1633 = vadd.f32 %v1629, %v1632
    %vm1634 = vweird.f32 %v1613
    %vm1635 = vweird.f32 %v1629
    %vm1636 = vmor %vm1634, %vm1635
    %v1637 = vsel %vm1636, %v1629, %v1633
    %v1638 = vand.u32 2147483647, %v1613
    %vm1639 = vcmp.eq.f32.partialorder %v1638, 8.507059e+37
    %v1640 = vand.u32 %v1613, 2147483648
    %v1641 = vor.u32 1.1754944e-38, %v1640
    %v1642 = vsel %vm1639, %v1641, %v1637
    %v1643 = vmul.f32 1.0, %v1642
    %v1644 = vtanh.pop %v1605
    %v1646 = vrot.slane %v1559, 7
    %v1648 = vmul.f32 %v1628, %v1646
    %v1649 = vmul.f32 %v1628, %v1644
    %1651 = vrot.lane.b32.xlu0 %v1649, 64
    %v1652 = vpop.permute.xlu0 %1651
    %v1654 = vadd.f32 %v1648, %v1652
    %v1655 = vtanh.pop %v1654
    %v1656 = vmul.f32 %v1643, %v1655
    %v1657 = vpack.c.bf16 %v1656, %v1656
    %v1659 = vrot.slane %v1657, 2
    %1660 = vrot.lane.b32.xlu0 %v1659, 64
    %v1661 = vpop.permute.xlu0 %1660
    %v1663 = vsel %vm109, %v1661, 0
    %1665 = vmatpush.bf16.msra.mxu0 0
    %1666 = vmatpush.bf16.msra.mxu0 0
    %1667 = vmatpush.bf16.msra.mxu0 0
    %1668 = vmatpush.bf16.msra.mxu0 0
    %1669 = vmatpush.bf16.msra.mxu0 %v1197
    %1670 = vmatpush.bf16.msra.mxu0 %v1195
    %1671 = vmatpush.bf16.msra.mxu0 %v1193
    %1672 = vmatpush.bf16.msra.mxu0 %v1191
    %1673 = vmatmul.bf16.gmra.mxu0 %v1663
    %v1674 = vpop.f32.mrf.mxu0
    %v1675 = vadd.f32 0.0, %v1674
    %v1676 = vpop.f32.mrf.mxu0
    %1677 = vdwg.mxu0
    %1678 = vmatpush.bf16.msra.mxu0 0
    %1679 = vmatpush.bf16.msra.mxu0 0
    %1680 = vmatpush.bf16.msra.mxu0 0
    %1681 = vmatpush.bf16.msra.mxu0 0
    %1682 = vmatpush.bf16.msra.mxu0 %v1198
    %1683 = vmatpush.bf16.msra.mxu0 %v1196
    %1684 = vmatpush.bf16.msra.mxu0 %v1194
    %1685 = vmatpush.bf16.msra.mxu0 %v1192
    %1686 = vmatmul.bf16.gmra.mxu0 %v1663
    %v1687 = vpop.f32.mrf.mxu0
    %v1688 = vadd.f32 0.0, %v1687
    %v1689 = vpop.f32.mrf.mxu0
    %1690 = vdwg.mxu0
    %v1693 = vrot.slane %v1675, 3
    %v1694 = vrot.slane %v1688, 3
    %v1697 = vadd.f32 %v1165, %v1693
    %v1698 = vadd.f32 %v1166, %v1694
    %v1699 = vxor.u32 %v1697, 2147483648
    %v1700 = vxor.u32 %v1698, 2147483648
    %v1701 = vmul.f32 %v1699, 1.442695
    %v1702 = vpow.pop %v1701
    %v1703 = vmul.f32 %v1700, 1.442695
    %v1704 = vpow.pop %v1703
    %v1705 = vadd.f32 %v1702, 1.0
    %v1706 = vadd.f32 %v1704, 1.0
    %v1707 = vrcp.pop %v1705
    %v1708 = vmul.f32 %v1705, %v1707
    %v1709 = vsub.f32 1.0, %v1708
    %v1710 = vmul.f32 %v1707, %v1709
    %v1711 = vadd.f32 %v1707, %v1710
    %vm1712 = vweird.f32 %v1705
    %vm1713 = vweird.f32 %v1707
    %vm1714 = vmor %vm1712, %vm1713
    %v1715 = vsel %vm1714, %v1707, %v1711
    %v1716 = vand.u32 2147483647, %v1705
    %vm1717 = vcmp.eq.f32.partialorder %v1716, 8.507059e+37
    %v1718 = vand.u32 %v1705, 2147483648
    %v1719 = vor.u32 1.1754944e-38, %v1718
    %v1720 = vsel %vm1717, %v1719, %v1715
    %v1721 = vmul.f32 1.0, %v1720
    %v1722 = vrcp.pop %v1706
    %v1723 = vmul.f32 %v1706, %v1722
    %v1724 = vsub.f32 1.0, %v1723
    %v1725 = vmul.f32 %v1722, %v1724
    %v1726 = vadd.f32 %v1722, %v1725
    %vm1727 = vweird.f32 %v1706
    %vm1728 = vweird.f32 %v1722
    %vm1729 = vmor %vm1727, %vm1728
    %v1730 = vsel %vm1729, %v1722, %v1726
    %v1731 = vand.u32 2147483647, %v1706
    %vm1732 = vcmp.eq.f32.partialorder %v1731, 8.507059e+37
    %v1733 = vand.u32 %v1706, 2147483648
    %v1734 = vor.u32 1.1754944e-38, %v1733
    %v1735 = vsel %vm1732, %v1734, %v1730
    %v1736 = vmul.f32 1.0, %v1735
    %v1737 = vtanh.pop %v1698
    %v1739 = vrot.slane %v1654, 7
    %v1741 = vmul.f32 %v1721, %v1739
    %v1742 = vmul.f32 %v1721, %v1737
    %1744 = vrot.lane.b32.xlu0 %v1742, 64
    %v1745 = vpop.permute.xlu0 %1744
    %v1747 = vadd.f32 %v1741, %v1745
    %v1748 = vtanh.pop %v1747
    %v1749 = vmul.f32 %v1736, %v1748
    %v1750 = vpack.c.bf16 %v1749, %v1749
    %v1752 = vshrl.u32 %v1750, 16
    %v1754 = vrot.slane %v1752, 2
    %1755 = vrot.lane.b32.xlu0 %v1754, 64
    %v1756 = vpop.permute.xlu0 %1755
    %v1758 = vsel %vm109, %v1756, 0
    %1760 = vmatpush.bf16.msra.mxu0 0
    %1761 = vmatpush.bf16.msra.mxu0 0
    %1762 = vmatpush.bf16.msra.mxu0 0
    %1763 = vmatpush.bf16.msra.mxu0 0
    %1764 = vmatpush.bf16.msra.mxu0 %v1197
    %1765 = vmatpush.bf16.msra.mxu0 %v1195
    %1766 = vmatpush.bf16.msra.mxu0 %v1193
    %1767 = vmatpush.bf16.msra.mxu0 %v1191
    %1768 = vmatmul.bf16.gmra.mxu0 %v1758
    %v1769 = vpop.f32.mrf.mxu0
    %v1770 = vadd.f32 0.0, %v1769
    %v1771 = vpop.f32.mrf.mxu0
    %1772 = vdwg.mxu0
    %1773 = vmatpush.bf16.msra.mxu0 0
    %1774 = vmatpush.bf16.msra.mxu0 0
    %1775 = vmatpush.bf16.msra.mxu0 0
    %1776 = vmatpush.bf16.msra.mxu0 0
    %1777 = vmatpush.bf16.msra.mxu0 %v1198
    %1778 = vmatpush.bf16.msra.mxu0 %v1196
    %1779 = vmatpush.bf16.msra.mxu0 %v1194
    %1780 = vmatpush.bf16.msra.mxu0 %v1192
    %1781 = vmatmul.bf16.gmra.mxu0 %v1758
    %v1782 = vpop.f32.mrf.mxu0
    %v1783 = vadd.f32 0.0, %v1782
    %v1784 = vpop.f32.mrf.mxu0
    %1785 = vdwg.mxu0
    %v1788 = vrot.slane %v1770, 2
    %v1789 = vrot.slane %v1783, 2
    %v1792 = vadd.f32 %v1165, %v1788
    %v1793 = vadd.f32 %v1166, %v1789
    %v1794 = vxor.u32 %v1792, 2147483648
    %v1795 = vxor.u32 %v1793, 2147483648
    %v1796 = vmul.f32 %v1794, 1.442695
    %v1797 = vpow.pop %v1796
    %v1798 = vmul.f32 %v1795, 1.442695
    %v1799 = vpow.pop %v1798
    %v1800 = vadd.f32 %v1797, 1.0
    %v1801 = vadd.f32 %v1799, 1.0
    %v1802 = vrcp.pop %v1800
    %v1803 = vmul.f32 %v1800, %v1802
    %v1804 = vsub.f32 1.0, %v1803
    %v1805 = vmul.f32 %v1802, %v1804
    %v1806 = vadd.f32 %v1802, %v1805
    %vm1807 = vweird.f32 %v1800
    %vm1808 = vweird.f32 %v1802
    %vm1809 = vmor %vm1807, %vm1808
    %v1810 = vsel %vm1809, %v1802, %v1806
    %v1811 = vand.u32 2147483647, %v1800
    %vm1812 = vcmp.eq.f32.partialorder %v1811, 8.507059e+37
    %v1813 = vand.u32 %v1800, 2147483648
    %v1814 = vor.u32 1.1754944e-38, %v1813
    %v1815 = vsel %vm1812, %v1814, %v1810
    %v1816 = vmul.f32 1.0, %v1815
    %v1817 = vrcp.pop %v1801
    %v1818 = vmul.f32 %v1801, %v1817
    %v1819 = vsub.f32 1.0, %v1818
    %v1820 = vmul.f32 %v1817, %v1819
    %v1821 = vadd.f32 %v1817, %v1820
    %vm1822 = vweird.f32 %v1801
    %vm1823 = vweird.f32 %v1817
    %vm1824 = vmor %vm1822, %vm1823
    %v1825 = vsel %vm1824, %v1817, %v1821
    %v1826 = vand.u32 2147483647, %v1801
    %vm1827 = vcmp.eq.f32.partialorder %v1826, 8.507059e+37
    %v1828 = vand.u32 %v1801, 2147483648
    %v1829 = vor.u32 1.1754944e-38, %v1828
    %v1830 = vsel %vm1827, %v1829, %v1825
    %v1831 = vmul.f32 1.0, %v1830
    %v1832 = vtanh.pop %v1793
    %v1834 = vrot.slane %v1747, 7
    %v1836 = vmul.f32 %v1816, %v1834
    %v1837 = vmul.f32 %v1816, %v1832
    %1839 = vrot.lane.b32.xlu0 %v1837, 64
    %v1840 = vpop.permute.xlu0 %1839
    %v1842 = vadd.f32 %v1836, %v1840
    %v1843 = vtanh.pop %v1842
    %v1844 = vmul.f32 %v1831, %v1843
    %v1845 = vpack.c.bf16 %v1844, %v1844
    %v1847 = vrot.slane %v1845, 3
    %1848 = vrot.lane.b32.xlu0 %v1847, 64
    %v1849 = vpop.permute.xlu0 %1848
    %v1851 = vsel %vm109, %v1849, 0
    %1853 = vmatpush.bf16.msra.mxu0 0
    %1854 = vmatpush.bf16.msra.mxu0 0
    %1855 = vmatpush.bf16.msra.mxu0 0
    %1856 = vmatpush.bf16.msra.mxu0 0
    %1857 = vmatpush.bf16.msra.mxu0 %v1197
    %1858 = vmatpush.bf16.msra.mxu0 %v1195
    %1859 = vmatpush.bf16.msra.mxu0 %v1193
    %1860 = vmatpush.bf16.msra.mxu0 %v1191
    %1861 = vmatmul.bf16.gmra.mxu0 %v1851
    %v1862 = vpop.f32.mrf.mxu0
    %v1863 = vadd.f32 0.0, %v1862
    %v1864 = vpop.f32.mrf.mxu0
    %1865 = vdwg.mxu0
    %1866 = vmatpush.bf16.msra.mxu0 0
    %1867 = vmatpush.bf16.msra.mxu0 0
    %1868 = vmatpush.bf16.msra.mxu0 0
    %1869 = vmatpush.bf16.msra.mxu0 0
    %1870 = vmatpush.bf16.msra.mxu0 %v1198
    %1871 = vmatpush.bf16.msra.mxu0 %v1196
    %1872 = vmatpush.bf16.msra.mxu0 %v1194
    %1873 = vmatpush.bf16.msra.mxu0 %v1192
    %1874 = vmatmul.bf16.gmra.mxu0 %v1851
    %v1875 = vpop.f32.mrf.mxu0
    %v1876 = vadd.f32 0.0, %v1875
    %v1877 = vpop.f32.mrf.mxu0
    %1878 = vdwg.mxu0
    %v1881 = vrot.slane %v1863, 1
    %v1882 = vrot.slane %v1876, 1
    %v1885 = vadd.f32 %v1165, %v1881
    %v1886 = vadd.f32 %v1166, %v1882
    %v1887 = vxor.u32 %v1885, 2147483648
    %v1888 = vxor.u32 %v1886, 2147483648
    %v1889 = vmul.f32 %v1887, 1.442695
    %v1890 = vpow.pop %v1889
    %v1891 = vmul.f32 %v1888, 1.442695
    %v1892 = vpow.pop %v1891
    %v1893 = vadd.f32 %v1890, 1.0
    %v1894 = vadd.f32 %v1892, 1.0
    %v1895 = vrcp.pop %v1893
    %v1896 = vmul.f32 %v1893, %v1895
    %v1897 = vsub.f32 1.0, %v1896
    %v1898 = vmul.f32 %v1895, %v1897
    %v1899 = vadd.f32 %v1895, %v1898
    %vm1900 = vweird.f32 %v1893
    %vm1901 = vweird.f32 %v1895
    %vm1902 = vmor %vm1900, %vm1901
    %v1903 = vsel %vm1902, %v1895, %v1899
    %v1904 = vand.u32 2147483647, %v1893
    %vm1905 = vcmp.eq.f32.partialorder %v1904, 8.507059e+37
    %v1906 = vand.u32 %v1893, 2147483648
    %v1907 = vor.u32 1.1754944e-38, %v1906
    %v1908 = vsel %vm1905, %v1907, %v1903
    %v1909 = vmul.f32 1.0, %v1908
    %v1910 = vrcp.pop %v1894
    %v1911 = vmul.f32 %v1894, %v1910
    %v1912 = vsub.f32 1.0, %v1911
    %v1913 = vmul.f32 %v1910, %v1912
    %v1914 = vadd.f32 %v1910, %v1913
    %vm1915 = vweird.f32 %v1894
    %vm1916 = vweird.f32 %v1910
    %vm1917 = vmor %vm1915, %vm1916
    %v1918 = vsel %vm1917, %v1910, %v1914
    %v1919 = vand.u32 2147483647, %v1894
    %vm1920 = vcmp.eq.f32.partialorder %v1919, 8.507059e+37
    %v1921 = vand.u32 %v1894, 2147483648
    %v1922 = vor.u32 1.1754944e-38, %v1921
    %v1923 = vsel %vm1920, %v1922, %v1918
    %v1924 = vmul.f32 1.0, %v1923
    %v1925 = vtanh.pop %v1886
    %v1927 = vrot.slane %v1842, 7
    %v1929 = vmul.f32 %v1909, %v1927
    %v1930 = vmul.f32 %v1909, %v1925
    %1932 = vrot.lane.b32.xlu0 %v1930, 64
    %v1933 = vpop.permute.xlu0 %1932
    %v1935 = vadd.f32 %v1929, %v1933
    %v1936 = vtanh.pop %v1935
    %v1937 = vmul.f32 %v1924, %v1936
    %v1938 = vsel %vm166, %v1282, %v1374
    %v1939 = vsel %vm169, %v1938, %v1468
    %v1940 = vsel %vm172, %v1939, %v1561
    %v1941 = vsel %vm175, %v1940, %v1656
    %v1942 = vsel %vm178, %v1941, %v1749
    %v1943 = vsel %vm181, %v1942, %v1844
    %v1944 = vsel %vm184, %v1943, %v1937
    %v1946 = vrot.slane %v1937, 7
    %v1949 = vrot.slane %v1844, 5
    %v1952 = vrot.slane %v1749, 3
    %v1955 = vrot.slane %v1656, 1
    %v1958 = vrot.slane %v1561, 7
    %v1961 = vrot.slane %v1468, 5
    %v1964 = vrot.slane %v1374, 3
    %v1967 = vrot.slane %v1282, 1
    %v1969 = vsel %vm166, %v1946, %v1949
    %v1970 = vsel %vm169, %v1969, %v1952
    %v1971 = vsel %vm172, %v1970, %v1955
    %v1972 = vsel %vm175, %v1971, %v1958
    %v1973 = vsel %vm178, %v1972, %v1961
    %v1974 = vsel %vm181, %v1973, %v1964
    %v1975 = vsel %vm184, %v1974, %v1967
    %1977 = vrot.lane.b32.xlu0 %v1944, 64
    %v1978 = vpop.permute.xlu0 %1977
    %1981 = vrot.lane.b32.xlu0 %v1975, 64
    %v1982 = vpop.permute.xlu0 %1981
    %v1984 = vsel %vm992, %v1978, %v1982
    %v1985 = vpack.c.bf16 %v1984, %v1984
    %s1986 = scalar_lea.vmem [#allocation2], 256
    %v1987 = vld [vmem:[%s1986] sm:$0xff]
    %v1988 = vld [vmem:[%s1986 + $0x8] sm:$0xff]
    %v1989 = vld [vmem:[%s1986 + $0x10] sm:$0xff]
    %v1990 = vld [vmem:[%s1986 + $0x18] sm:$0xff]
    %v1991 = vld [vmem:[%s1986 + $0x20] sm:$0xff]
    %v1992 = vld [vmem:[%s1986 + $0x28] sm:$0xff]
    %v1993 = vld [vmem:[%s1986 + $0x30] sm:$0xff]
    %v1994 = vld [vmem:[%s1986 + $0x38] sm:$0xff]
    %v1996 = vperm.slane %v55, 0
    %v1997 = vperm.slane %v55, 1
    %v2008 = vunpack.c.l.b16 %v1987
    %v2009 = vunpack.c.h.b16 %v1987
    %v2010 = vunpack.c.l.b16 %v1988
    %v2011 = vunpack.c.h.b16 %v1988
    %v2012 = vunpack.c.l.b16 %v1989
    %v2013 = vunpack.c.h.b16 %v1989
    %v2014 = vunpack.c.l.b16 %v1990
    %v2015 = vunpack.c.h.b16 %v1990
    %v2016 = vunpack.c.l.b16 %v1991
    %v2017 = vunpack.c.h.b16 %v1991
    %v2018 = vunpack.c.l.b16 %v1992
    %v2019 = vunpack.c.h.b16 %v1992
    %v2020 = vunpack.c.l.b16 %v1993
    %v2021 = vunpack.c.h.b16 %v1993
    %v2022 = vunpack.c.l.b16 %v1994
    %v2023 = vunpack.c.h.b16 %v1994
    %v2024 = vpack.c.b16 %v2010, %v2008
    %v2025 = vpack.c.b16 %v2011, %v2009
    %v2026 = vpack.c.b16 %v2014, %v2012
    %v2027 = vpack.c.b16 %v2015, %v2013
    %v2028 = vpack.c.b16 %v2018, %v2016
    %v2029 = vpack.c.b16 %v2019, %v2017
    %v2030 = vpack.c.b16 %v2022, %v2020
    %v2031 = vpack.c.b16 %v2023, %v2021
    %v2041 = vsel %vm109, %v1985, 0
    %2043 = vmatpush.bf16.msra.mxu0 0
    %2044 = vmatpush.bf16.msra.mxu0 0
    %2045 = vmatpush.bf16.msra.mxu0 0
    %2046 = vmatpush.bf16.msra.mxu0 0
    %2047 = vmatpush.bf16.msra.mxu0 %v2030
    %2048 = vmatpush.bf16.msra.mxu0 %v2028
    %2049 = vmatpush.bf16.msra.mxu0 %v2026
    %2050 = vmatpush.bf16.msra.mxu0 %v2024
    %2051 = vmatmul.bf16.gmra.mxu0 %v2041
    %v2052 = vpop.f32.mrf.mxu0
    %v2053 = vadd.f32 %v1996, %v2052
    %v2054 = vpop.f32.mrf.mxu0
    %2055 = vdwg.mxu0
    %2056 = vmatpush.bf16.msra.mxu0 0
    %2057 = vmatpush.bf16.msra.mxu0 0
    %2058 = vmatpush.bf16.msra.mxu0 0
    %2059 = vmatpush.bf16.msra.mxu0 0
    %2060 = vmatpush.bf16.msra.mxu0 %v2031
    %2061 = vmatpush.bf16.msra.mxu0 %v2029
    %2062 = vmatpush.bf16.msra.mxu0 %v2027
    %2063 = vmatpush.bf16.msra.mxu0 %v2025
    %2064 = vmatmul.bf16.gmra.mxu0 %v2041
    %v2065 = vpop.f32.mrf.mxu0
    %v2066 = vadd.f32 %v1997, %v2065
    %v2067 = vpop.f32.mrf.mxu0
    %2068 = vdwg.mxu0
    %v2069 = vld [vmem:[%s1] sm:$0xff]
    %2070 = vset.pattern.permute.xlu0 0
    %2071 = vperm.xlu0 %2070, %v2069
    %v2072 = vpop.permute.xlu0 %2071
    %vm2073 = vcmp.eq.s32.totalorder %v188, %v2072
    %vm2074 = vcmp.eq.s32.totalorder %v189, %v2072
    %v2075 = vsel %vm2073, %v2053, 0.0
    %v2076 = vsel %vm2074, %v2066, 0.0
    %v2077 = vadd.f32 %v2075, %v2076
    %2078 = vadd.xlane.f32.xlu0 %v2077
    %v2079 = vpop.xlane.xlu0 %2078
    %v2080 = vmax.f32 %v2053, %v2066
    %2081 = vmax.xlane.f32.xlu0 %v2080
    %v2082 = vpop.xlane.xlu0 %2081
    %v2083 = vsub.f32 %v2053, %v2082
    %v2084 = vsub.f32 %v2066, %v2082
    %v2085 = vmul.f32 %v2083, 1.442695
    %v2086 = vpow.pop %v2085
    %v2087 = vmul.f32 %v2084, 1.442695
    %v2088 = vpow.pop %v2087
    %v2089 = vadd.f32 %v2086, %v2088
    %2090 = vadd.xlane.f32.xlu0 %v2089
    %v2091 = vpop.xlane.xlu0 %2090
    %v2092 = vlog2.pop %v2091
    %v2093 = vmul.f32 %v2092, 0.6931472
    %v2094 = vadd.f32 %v2082, %v2093
    %v2095 = vsub.f32 %v2079, %v2094
    %vm2096 = vcmask 7168
    %v2097 = vsel %vm2096, %v2095, 0.0
    %2098 = vadd.xlane.f32.xlu0 %v2097
    %v2099 = vpop.xlane.xlu0 %2098
    %v2100 = vrot.slane %v2099, 4
    %v2101 = vadd.f32 %v2099, %v2100
    %v2102 = vrot.slane %v2101, 2
    %v2103 = vadd.f32 %v2101, %v2102
    %v2104 = vrot.slane %v2103, 1
    %v2105 = vadd.f32 %v2103, %v2104
    %s2106 = vtos %v2105
    %v2107 = vrcp.pop 8.0
    %v2108 = vmul.f32 8.0, %v2107
    %v2109 = vsub.f32 1.0, %v2108
    %v2110 = vmul.f32 %v2107, %v2109
    %v2111 = vadd.f32 %v2107, %v2110
    %vm2112 = vweird.f32 %v2107
    %v2113 = vsel %vm2112, %v2107, %v2111
    %s2114 = vtos %v2113
    %s2115 = smul.f32 %s2106, %s2114
    %s2116 = ssub.f32 0.0, %s2115
    %s2117 = scalar_lea.smem [#allocation7], 0
    %2118 = sst [smem:[%s2117]] %s2116
    // Predicated region
    $region26: #{tpu_custom_call.1} parent=1 // pred_check
      _
    $region27: #{tpu_custom_call.1} parent=1 // pred_check_branch
      %2120 = sbr.rel (0) target = $region29
    $region28: #{tpu_custom_call.1} parent=1 // pred_region
      %2122 = vsyncadd [#allocation4], 0
      %s2124 = sshll.u32 %s4, 4
      %s2125 = int_to_ptr.hbm [resolvable:$true] %s2124
      %2127 = dma.smem_to_hbm [#allocation7], 16, %s2125, [#allocation4]
    $region29: #{tpu_custom_call.1} parent=1 // pred_fallthru
      _
    // Predicated region
    $region30: #{tpu_custom_call.1} parent=1 // pred_check
      _
    $region31: #{tpu_custom_call.1} parent=1 // pred_check_branch
      %2129 = sbr.rel (0) target = $region33
    $region32: #{tpu_custom_call.1} parent=1 // pred_region
      %2131 = dma.done [#allocation4], 16
    $region33: #{tpu_custom_call.1} parent=1 // pred_fallthru
      _
    %2132 = sfence
    %2133 = vsyncpa [#allocation3], 1
    %2134 = vsyncpa [#allocation6], 1
    %2135 = vsyncpa [#allocation4], 1

</llo_original>
